<compile_context>
chip_gen: v7x
topology: tpu7x:2x2x1
jax: 0.10.0
libtpu: 0.0.40
codegen_flags: <defaults>
</compile_context>

<pallas_src>
import functools
import math

import jax
import jax.numpy as jnp
from jax.experimental import pallas as pl
from jax.experimental.pallas import tpu as pltpu

_LANE = 128  # lane width; also the padded width of the folded tail output


def _round_up(n, m):
    return ((n + m - 1) // m) * m


def _mlp_kernel(x_ref, w1_ref, b1_ref, wt_ref, bt_ref, o_ref):
    # Cast x per-tile in-register (the HBM copy stays in its stored dtype; no
    # separate full-batch XLA pad/cast pass in the wrapper).
    x = x_ref[...].astype(w1_ref.dtype)
    # Layer 1: (tb, F) @ (F, 1024), f32 accumulation on the MXU.
    # Dropout(0.2) after it is identity in eval mode.
    h = jnp.dot(x, w1_ref[...], preferred_element_type=jnp.float32) + b1_ref[...]
    # Layers 2..5 folded into one lane-padded (1024, 128) affine map (only
    # column 0 is meaningful).  The f32 layer-1 result is downcast to the
    # compute dtype here (bf16 by default) -- deliberate precision choice.
    h = jnp.dot(h.astype(wt_ref.dtype), wt_ref[...],
                preferred_element_type=jnp.float32) + bt_ref[...]
    # Transpose the (tb, 128) result so the useful column becomes a lane-dense
    # (1, tb) row: HBM writeback drops to 4 B per batch row, no masked vst.
    o_ref[...] = jnp.transpose(h)[0:1, :].astype(o_ref.dtype)


def _fold_tail(params):
    """Fold Linear(1024,128), (128,64), (64,16), (16,1) into one (1024,1) affine map."""
    (w2, b2), (w3, b3), (w4, b4), (w5, b5) = params[1], params[2], params[3], params[4]
    w_t = w2 @ w3 @ w4 @ w5                            # (1024, 1)
    b_t = ((b2 @ w3 + b3) @ w4 + b4) @ w5 + b5         # (1, 1)
    return w_t, b_t


@functools.partial(jax.jit, static_argnames=("block_b", "compute_dtype"))
def aesthetic_predictor_forward(x, params, *, block_b=1024,
                                compute_dtype=jnp.bfloat16):
    """x: (B, input_size).  params: list of (W, b), W (in, out), b (1, out)."""
    B, F = x.shape
    w1, b1 = params[0]
    H1 = w1.shape[1]   # 1024

    # Fold the tail layers and lane-pad the (H1, 1) map to 128 output columns.
    w_t, b_t = _fold_tail(params)
    wt_p = jnp.zeros((H1, _LANE), jnp.float32).at[:, :1].set(w_t)
    bt_p = jnp.zeros((1, _LANE), jnp.float32).at[:, :1].set(b_t)

    # Batch tile: multiple of 128 so the transposed (1, tb) output row is
    # lane-dense.  No wrapper-side padding: the last grid block may be partial.
    tb = max(_LANE, min(_round_up(block_b, _LANE), _round_up(B, _LANE)))
    n_steps = pl.cdiv(B, tb)
    # For large B, make sure the grid has >= 4 steps so both v7x TensorCores
    # get work under the "parallel" batch axis, but keep tb >= 512 rows so the
    # ~0.35us per-step pipeline overhead stays amortized on v6e.
    if n_steps < 4 and B > 4 * 512:
        tb = max(512, _round_up(pl.cdiv(B, 4), _LANE))
        n_steps = pl.cdiv(B, tb)

    w1_c = w1.astype(compute_dtype)
    wt_c = wt_p.astype(compute_dtype)
    b1_c = b1.astype(jnp.float32)
    bt_c = bt_p.astype(jnp.float32)

    def resident(shape):
        # Constant block index -> DMA'd once, stays VMEM-resident across the grid.
        return pl.BlockSpec(shape, lambda i: (0, 0))

    w_item = jnp.dtype(compute_dtype).itemsize
    flops = 2 * n_steps * tb * (F * H1 + H1 * _LANE)
    bytes_accessed = (
        B * F * x.dtype.itemsize                 # x (read in stored dtype)
        + (F * H1 + H1 * _LANE) * w_item         # weights
        + (H1 + _LANE) * 4                       # biases (f32)
        + n_steps * tb * 4                       # transposed output row (f32)
    )

    out = pl.pallas_call(
        _mlp_kernel,
        out_shape=jax.ShapeDtypeStruct((1, n_steps * tb), jnp.float32),
        grid=(n_steps,),
        in_specs=[
            pl.BlockSpec((tb, F), lambda i: (i, 0)),       # x: batch-tiled, partial last block
            resident((F, H1)), resident((1, H1)),          # layer 1
            resident((H1, _LANE)), resident((1, _LANE)),   # folded tail (lane-padded)
        ],
        out_specs=pl.BlockSpec((1, tb), lambda i: (0, i)),
        compiler_params=pltpu.CompilerParams(
            dimension_semantics=("parallel",),
            vmem_limit_bytes=48 * 1024 * 1024),
        cost_estimate=pl.CostEstimate(flops=flops, transcendentals=0,
                                      bytes_accessed=bytes_accessed),
    )(x, w1_c, b1_c, wt_c, bt_c)

    # Strip the batch padding of the partial last block; restore (B, 1) shape.
    return out[0, :B].reshape(B, 1)


def init_params(input_size, key):
    """Deterministic init mirroring nn.Linear's U(-1/sqrt(fan_in), +1/sqrt(fan_in))."""
    dims = [input_size, 1024, 128, 64, 16, 1]
    params = []
    for i in range(len(dims) - 1):
        fan_in, fan_out = dims[i], dims[i + 1]
        key, kw, kb = jax.random.split(key, 3)
        bound = 1.0 / math.sqrt(fan_in)
        # stored as (in, out) = transpose of PyTorch's nn.Linear.weight (out, in)
        w = jax.random.uniform(kw, (fan_in, fan_out), jnp.float32,
                               minval=-bound, maxval=bound)
        b = jax.random.uniform(kb, (1, fan_out), jnp.float32,
                               minval=-bound, maxval=bound)
        params.append((w, b))
    return params


def reference_forward(x, params):
    """Plain-JAX f32 reference: sequential Linear layers (Dropout = identity)."""
    h = x
    for w, b in params:
        h = h @ w + b
    return h


if __name__ == "__main__":
    key = jax.random.PRNGKey(0)
    k_in, k_in2, k_params = jax.random.split(key, 3)

    # --- small test shape (B < tile -> exercises the partial boundary block) ---
    batch = 8
    input_size = 32
    x = jax.random.normal(k_in, (batch, input_size), jnp.float32)
    params = init_params(input_size, k_params)
    ref = reference_forward(x, params)

    # f32 compute path: tight check against the reference (the tail fold only
    # reorders fp ops).
    out_f32 = jax.block_until_ready(
        aesthetic_predictor_forward(x, params, compute_dtype=jnp.float32))
    assert out_f32.shape == (batch, 1), out_f32.shape
    assert jnp.allclose(out_f32, ref, atol=1e-4, rtol=1e-4), (out_f32, ref)

    # default bf16 compute path (f32 accumulation): loose tolerance vs f32 reference.
    out_bf16 = jax.block_until_ready(aesthetic_predictor_forward(x, params))
    assert out_bf16.shape == (batch, 1), out_bf16.shape
    assert jnp.allclose(out_bf16, ref, atol=5e-2, rtol=5e-2), (out_bf16, ref)

    # --- second shape: multi-step grid with a partial last batch block ---
    batch2 = 200
    x2 = jax.random.normal(k_in2, (batch2, input_size), jnp.float32)
    ref2 = reference_forward(x2, params)
    out2 = jax.block_until_ready(
        aesthetic_predictor_forward(x2, params, block_b=128,
                                    compute_dtype=jnp.float32))
    assert out2.shape == (batch2, 1), out2.shape
    assert jnp.allclose(out2, ref2, atol=1e-4, rtol=1e-4), (out2, ref2)

    print("KERNEL_OK")
</pallas_src>

<mosaic_0001>
module attributes {stable_mosaic.version = 11 : i64} {
  func.func @_mlp_kernel(%arg0: i32, %arg1: memref<128x32xf32, #tpu.memory_space<vmem>>, %arg2: memref<32x1024xf32, #tpu.memory_space<vmem>>, %arg3: memref<1x1024xf32, #tpu.memory_space<vmem>>, %arg4: memref<1024x128xf32, #tpu.memory_space<vmem>>, %arg5: memref<1x128xf32, #tpu.memory_space<vmem>>, %arg6: memref<1x128xf32, #tpu.memory_space<vmem>>) attributes {dimension_semantics = [#tpu.dimension_semantics<parallel>], iteration_bounds = array<i64: 1>, scalar_prefetch = 0 : i64, scratch_operands = 0 : i64, tpu.core_type = #tpu.core_type<tc>, window_params = [{transform_indices = @transform_0, window_bounds = array<i64: 128, 32>}, {pipeline_mode = #tpu.pipeline_mode<synchronous>, transform_indices = @transform_1, window_bounds = array<i64: 32, 1024>}, {pipeline_mode = #tpu.pipeline_mode<synchronous>, transform_indices = @transform_2, window_bounds = array<i64: 1, 1024>}, {pipeline_mode = #tpu.pipeline_mode<synchronous>, transform_indices = @transform_3, window_bounds = array<i64: 1024, 128>}, {pipeline_mode = #tpu.pipeline_mode<synchronous>, transform_indices = @transform_4, window_bounds = array<i64: 1, 128>}, {transform_indices = @transform_5, window_bounds = array<i64: 1, 128>}]} {
    %c0 = arith.constant 0 : index
    %c0_0 = arith.constant 0 : index
    %0 = vector.load %arg1[%c0, %c0_0] : memref<128x32xf32, #tpu.memory_space<vmem>>, vector<128x32xf32>
    %c0_1 = arith.constant 0 : index
    %c0_2 = arith.constant 0 : index
    %1 = vector.load %arg2[%c0_1, %c0_2] : memref<32x1024xf32, #tpu.memory_space<vmem>>, vector<32x1024xf32>
    %cst = arith.constant dense<0.000000e+00> : vector<128x1024xf32>
    %2 = tpu.matmul %0, %1, %cst {dimension_numbers = #tpu.dot_dimension_numbers<[1], [0], [0], [1], [0, 0, 1, 1], [], []>} : vector<128x32xf32>, vector<32x1024xf32>, vector<128x1024xf32> -> vector<128x1024xf32>
    %c0_3 = arith.constant 0 : index
    %c0_4 = arith.constant 0 : index
    %3 = vector.load %arg3[%c0_3, %c0_4] : memref<1x1024xf32, #tpu.memory_space<vmem>>, vector<1x1024xf32>
    %4 = vector.broadcast %3 : vector<1x1024xf32> to vector<128x1024xf32>
    %5 = arith.addf %2, %4 : vector<128x1024xf32>
    %c0_5 = arith.constant 0 : index
    %c0_6 = arith.constant 0 : index
    %6 = vector.load %arg4[%c0_5, %c0_6] : memref<1024x128xf32, #tpu.memory_space<vmem>>, vector<1024x128xf32>
    %cst_7 = arith.constant dense<0.000000e+00> : vector<128x128xf32>
    %7 = tpu.matmul %5, %6, %cst_7 {dimension_numbers = #tpu.dot_dimension_numbers<[1], [0], [0], [1], [0, 0, 1, 1], [], []>} : vector<128x1024xf32>, vector<1024x128xf32>, vector<128x128xf32> -> vector<128x128xf32>
    %c0_8 = arith.constant 0 : index
    %c0_9 = arith.constant 0 : index
    %8 = vector.load %arg5[%c0_8, %c0_9] : memref<1x128xf32, #tpu.memory_space<vmem>>, vector<1x128xf32>
    %9 = vector.broadcast %8 : vector<1x128xf32> to vector<128x128xf32>
    %10 = arith.addf %7, %9 : vector<128x128xf32>
    %11 = tpu.transpose %10, [1, 0] : vector<128x128xf32> -> vector<128x128xf32>
    %12 = vector.extract_strided_slice %11 {offsets = [0, 0], sizes = [1, 128], strides = [1, 1]} : vector<128x128xf32> to vector<1x128xf32>
    %c0_10 = arith.constant 0 : index
    %c0_11 = arith.constant 0 : index
    %13 = vector.load %arg6[%c0_10, %c0_11] : memref<1x128xf32, #tpu.memory_space<vmem>>, vector<1x128xf32>
    tpu.vector_store %arg6[%c0_10, %c0_11], %12 {strides = array<i32>} : memref<1x128xf32, #tpu.memory_space<vmem>>, vector<1x128xf32>,
    return
  }
  func.func @transform_0(%arg0: i32) -> (i32, i32) {
    %c0_i32 = arith.constant 0 : i32
    %c0_i32_0 = arith.constant 0 : i32
    return %arg0, %c0_i32 : i32, i32
  }
  func.func @transform_1(%arg0: i32) -> (i32, i32) {
    %c0_i32 = arith.constant 0 : i32
    %c0_i32_0 = arith.constant 0 : i32
    %c0_i32_1 = arith.constant 0 : i32
    return %c0_i32, %c0_i32_0 : i32, i32
  }
  func.func @transform_2(%arg0: i32) -> (i32, i32) {
    %c0_i32 = arith.constant 0 : i32
    %c0_i32_0 = arith.constant 0 : i32
    %c0_i32_1 = arith.constant 0 : i32
    return %c0_i32, %c0_i32_0 : i32, i32
  }
  func.func @transform_3(%arg0: i32) -> (i32, i32) {
    %c0_i32 = arith.constant 0 : i32
    %c0_i32_0 = arith.constant 0 : i32
    %c0_i32_1 = arith.constant 0 : i32
    return %c0_i32, %c0_i32_0 : i32, i32
  }
  func.func @transform_4(%arg0: i32) -> (i32, i32) {
    %c0_i32 = arith.constant 0 : i32
    %c0_i32_0 = arith.constant 0 : i32
    %c0_i32_1 = arith.constant 0 : i32
    return %c0_i32, %c0_i32_0 : i32, i32
  }
  func.func @transform_5(%arg0: i32) -> (i32, i32) {
    %c0_i32 = arith.constant 0 : i32
    %c0_i32_0 = arith.constant 0 : i32
    return %c0_i32, %arg0 : i32, i32
  }
}

</mosaic_0001>

<llo_original>
// kernel: aesthetic_predictor_forward.1
$region0: #{aesthetic_predictor_forward.1}
  #allocation0 [shape = 'u32[]', space=smem, size = 0x4, offset = 0x4, fixed_abs, tag = 'smem constant byte address 0x4 - core index']
  #allocation1 [shape = 'u32[144,128]{1,0:T(1,128)}', space=vmem, size = 0x12000, scoped, tag = 'internal scratch']
  %s0 = inlined_call_operand.vmem [shape: f32[8,32], index: 0, kind: input, shape index: {}]
  %s1 = inlined_call_operand.vmem [shape: f32[32,1024], index: 1, kind: input, shape index: {}]
  %s2 = inlined_call_operand.vmem [shape: f32[1,1024], index: 2, kind: input, shape index: {}]
  %s3 = inlined_call_operand.vmem [shape: f32[1024,128], index: 3, kind: input, shape index: {}]
  %s4 = inlined_call_operand.vmem [shape: f32[1,128], index: 4, kind: input, shape index: {}]
  %s5 = inlined_call_operand.vmem [shape: f32[1,128], index: 5, kind: output, shape index: {}]
  %s6 = sld [smem:[#allocation0]]
  $region30: #{aesthetic_predictor_forward.1} parent=0
    _
  %s8 = ssub.s32 1, %s6
  %s9 = scalar_select 0, %s8, %s6
  // Predicated region
  $region2: #{aesthetic_predictor_forward.1} parent=0 // pred_check
    _
  $region3: #{aesthetic_predictor_forward.1} parent=0 // pred_check_branch
    %11 = sbr.rel (0) target = $region5
  $region4: #{aesthetic_predictor_forward.1} parent=0 // pred_region
    _
  $region5: #{aesthetic_predictor_forward.1} parent=0 // pred_fallthru
    _
  // Predicated region
  $region6: #{aesthetic_predictor_forward.1} parent=0 // pred_check
    _
  $region7: #{aesthetic_predictor_forward.1} parent=0 // pred_check_branch
    %13 = sbr.rel (0) target = $region9
  $region8: #{aesthetic_predictor_forward.1} parent=0 // pred_region
    _
  $region9: #{aesthetic_predictor_forward.1} parent=0 // pred_fallthru
    _
  // Predicated region
  $region10: #{aesthetic_predictor_forward.1} parent=0 // pred_check
    _
  $region11: #{aesthetic_predictor_forward.1} parent=0 // pred_check_branch
    %15 = sbr.rel (0) target = $region13
  $region12: #{aesthetic_predictor_forward.1} parent=0 // pred_region
    _
  $region13: #{aesthetic_predictor_forward.1} parent=0 // pred_fallthru
    _
  // Predicated region
  $region14: #{aesthetic_predictor_forward.1} parent=0 // pred_check
    _
  $region15: #{aesthetic_predictor_forward.1} parent=0 // pred_check_branch
    %17 = sbr.rel (0) target = $region17
  $region16: #{aesthetic_predictor_forward.1} parent=0 // pred_region
    _
  $region17: #{aesthetic_predictor_forward.1} parent=0 // pred_fallthru
    _
  // Predicated region
  $region18: #{aesthetic_predictor_forward.1} parent=0 // pred_check
    _
  $region19: #{aesthetic_predictor_forward.1} parent=0 // pred_check_branch
    %19 = sbr.rel (0) target = $region21
  $region20: #{aesthetic_predictor_forward.1} parent=0 // pred_region
    _
  $region21: #{aesthetic_predictor_forward.1} parent=0 // pred_fallthru
    _
  %v20 = vld [vmem:[%s0] sm:$0xff]
  %v21 = vld [vmem:[%s0 + $0x8] sm:$0xff]
  %v22 = vld [vmem:[%s0 + $0x10] sm:$0xff]
  %v23 = vld [vmem:[%s0 + $0x18] sm:$0xff]
  %v24 = vld [vmem:[%s0 + $0x20] sm:$0xff]
  %v25 = vld [vmem:[%s0 + $0x28] sm:$0xff]
  %v26 = vld [vmem:[%s0 + $0x30] sm:$0xff]
  %v27 = vld [vmem:[%s0 + $0x38] sm:$0xff]
  %v28 = vld [vmem:[%s0 + $0x40] sm:$0xff]
  %v29 = vld [vmem:[%s0 + $0x48] sm:$0xff]
  %v30 = vld [vmem:[%s0 + $0x50] sm:$0xff]
  %v31 = vld [vmem:[%s0 + $0x58] sm:$0xff]
  %v32 = vld [vmem:[%s0 + $0x60] sm:$0xff]
  %v33 = vld [vmem:[%s0 + $0x68] sm:$0xff]
  %v34 = vld [vmem:[%s0 + $0x70] sm:$0xff]
  %v35 = vld [vmem:[%s0 + $0x78] sm:$0xff]
  %v36 = vld [vmem:[%s1] sm:$0xff]
  %v37 = vld [vmem:[%s1 + $0x8] sm:$0xff]
  %v38 = vld [vmem:[%s1 + $0x10] sm:$0xff]
  %v39 = vld [vmem:[%s1 + $0x18] sm:$0xff]
  %v40 = vld [vmem:[%s1 + $0x20] sm:$0xff]
  %v41 = vld [vmem:[%s1 + $0x28] sm:$0xff]
  %v42 = vld [vmem:[%s1 + $0x30] sm:$0xff]
  %v43 = vld [vmem:[%s1 + $0x38] sm:$0xff]
  %v44 = vld [vmem:[%s1 + $0x40] sm:$0xff]
  %v45 = vld [vmem:[%s1 + $0x48] sm:$0xff]
  %v46 = vld [vmem:[%s1 + $0x50] sm:$0xff]
  %v47 = vld [vmem:[%s1 + $0x58] sm:$0xff]
  %v48 = vld [vmem:[%s1 + $0x60] sm:$0xff]
  %v49 = vld [vmem:[%s1 + $0x68] sm:$0xff]
  %v50 = vld [vmem:[%s1 + $0x70] sm:$0xff]
  %v51 = vld [vmem:[%s1 + $0x78] sm:$0xff]
  %v52 = vld [vmem:[%s1 + $0x80] sm:$0xff]
  %v53 = vld [vmem:[%s1 + $0x88] sm:$0xff]
  %v54 = vld [vmem:[%s1 + $0x90] sm:$0xff]
  %v55 = vld [vmem:[%s1 + $0x98] sm:$0xff]
  %v56 = vld [vmem:[%s1 + $0xa0] sm:$0xff]
  %v57 = vld [vmem:[%s1 + $0xa8] sm:$0xff]
  %v58 = vld [vmem:[%s1 + $0xb0] sm:$0xff]
  %v59 = vld [vmem:[%s1 + $0xb8] sm:$0xff]
  %v60 = vld [vmem:[%s1 + $0xc0] sm:$0xff]
  %v61 = vld [vmem:[%s1 + $0xc8] sm:$0xff]
  %v62 = vld [vmem:[%s1 + $0xd0] sm:$0xff]
  %v63 = vld [vmem:[%s1 + $0xd8] sm:$0xff]
  %v64 = vld [vmem:[%s1 + $0xe0] sm:$0xff]
  %v65 = vld [vmem:[%s1 + $0xe8] sm:$0xff]
  %v66 = vld [vmem:[%s1 + $0xf0] sm:$0xff]
  %v67 = vld [vmem:[%s1 + $0xf8] sm:$0xff]
  %v68 = vld [vmem:[%s2] sm:$0xff]
  %v70 = vlaneseq
  %v71 = vshrl.u32 %v70, 7
  %v72 = vsub.s32 0, %v71
  %v73 = vrot.slane %v68, %v72
  %v74 = vlaneseq
  %v75 = vshrl.u32 %v74, 7
  %v76 = vsub.s32 1, %v75
  %v77 = vrot.slane %v68, %v76
  %v78 = vlaneseq
  %v79 = vshrl.u32 %v78, 7
  %v80 = vsub.s32 2, %v79
  %v81 = vrot.slane %v68, %v80
  %v82 = vlaneseq
  %v83 = vshrl.u32 %v82, 7
  %v84 = vsub.s32 3, %v83
  %v85 = vrot.slane %v68, %v84
  %v86 = vlaneseq
  %v87 = vshrl.u32 %v86, 7
  %v88 = vsub.s32 4, %v87
  %v89 = vrot.slane %v68, %v88
  %v90 = vlaneseq
  %v91 = vshrl.u32 %v90, 7
  %v92 = vsub.s32 5, %v91
  %v93 = vrot.slane %v68, %v92
  %v94 = vlaneseq
  %v95 = vshrl.u32 %v94, 7
  %v96 = vsub.s32 6, %v95
  %v97 = vrot.slane %v68, %v96
  %v98 = vlaneseq
  %v99 = vshrl.u32 %v98, 7
  %v100 = vsub.s32 7, %v99
  %v101 = vrot.slane %v68, %v100
  %vm110 = vcmask 261120
  %v112 = vsel %vm110, %v20, 0
  %v115 = vsel %vm110, %v21, 0
  %v118 = vsel %vm110, %v22, 0
  %v121 = vsel %vm110, %v23, 0
  %v124 = vsel %vm110, %v24, 0
  %v127 = vsel %vm110, %v25, 0
  %v130 = vsel %vm110, %v26, 0
  %v133 = vsel %vm110, %v27, 0
  %v136 = vsel %vm110, %v28, 0
  %v139 = vsel %vm110, %v29, 0
  %v142 = vsel %vm110, %v30, 0
  %v145 = vsel %vm110, %v31, 0
  %v148 = vsel %vm110, %v32, 0
  %v151 = vsel %vm110, %v33, 0
  %v154 = vsel %vm110, %v34, 0
  %v157 = vsel %vm110, %v35, 0
  %159 = vmatprep.subr.mxu0 %v37
  %160 = vmatpush1.msra.mxu0 %v36
  %161 = vmatprep.subr.mxu0 %v45
  %162 = vmatpush1.msra.mxu0 %v44
  %163 = vmatprep.subr.mxu0 %v53
  %164 = vmatpush1.msra.mxu0 %v52
  %165 = vmatprep.subr.mxu0 %v61
  %166 = vmatpush1.msra.mxu0 %v60
  %167 = vmatprep.subr.mxu0 0.0
  %168 = vmatpush1.msra.mxu0 0.0
  %169 = vmatprep.subr.mxu0 0.0
  %170 = vmatpush1.msra.mxu0 0.0
  %171 = vmatprep.subr.mxu0 0.0
  %172 = vmatpush1.msra.mxu0 0.0
  %173 = vmatprep.subr.mxu0 0.0
  %174 = vmatpush1.msra.mxu0 0.0
  %175 = vmatprep.subr.mxu0 0.0
  %176 = vmatpush1.msra.mxu0 0.0
  %177 = vmatprep.subr.mxu0 0.0
  %178 = vmatpush1.msra.mxu0 0.0
  %179 = vmatprep.subr.mxu0 0.0
  %180 = vmatpush1.msra.mxu0 0.0
  %181 = vmatprep.subr.mxu0 0.0
  %182 = vmatpush1.msra.mxu0 0.0
  %183 = vmatprep.subr.mxu0 0.0
  %184 = vmatpush1.msra.mxu0 0.0
  %185 = vmatprep.subr.mxu0 0.0
  %186 = vmatpush1.msra.mxu0 0.0
  %187 = vmatprep.subr.mxu0 0.0
  %188 = vmatpush1.msra.mxu0 0.0
  %189 = vmatprep.subr.mxu0 0.0
  %190 = vmatpush1.msra.mxu0 0.0
  %191 = vmatprep.subr.mxu0 0.0
  %192 = vmatpush1.msra.mxu0 0.0
  %193 = vmatprep.subr.mxu0 0.0
  %194 = vmatpush1.msra.mxu0 0.0
  %195 = vmatprep.subr.mxu0 0.0
  %196 = vmatpush1.msra.mxu0 0.0
  %197 = vmatprep.subr.mxu0 0.0
  %198 = vmatpush1.msra.mxu0 0.0
  %199 = vmatprep.subr.mxu0 0.0
  %200 = vmatpush1.msra.mxu0 0.0
  %201 = vmatprep.subr.mxu0 0.0
  %202 = vmatpush1.msra.mxu0 0.0
  %203 = vmatprep.subr.mxu0 0.0
  %204 = vmatpush1.msra.mxu0 0.0
  %205 = vmatprep.subr.mxu0 0.0
  %206 = vmatpush1.msra.mxu0 0.0
  %207 = vmatprep.subr.mxu0 0.0
  %208 = vmatpush1.msra.mxu0 0.0
  %209 = vmatprep.subr.mxu0 0.0
  %210 = vmatpush1.msra.mxu0 0.0
  %211 = vmatprep.subr.mxu0 0.0
  %212 = vmatpush1.msra.mxu0 0.0
  %213 = vmatprep.subr.mxu0 0.0
  %214 = vmatpush1.msra.mxu0 0.0
  %215 = vmatprep.subr.mxu0 0.0
  %216 = vmatpush1.msra.mxu0 0.0
  %217 = vmatprep.subr.mxu0 0.0
  %218 = vmatpush1.msra.mxu0 0.0
  %219 = vmatprep.subr.mxu0 0.0
  %220 = vmatpush1.msra.mxu0 0.0
  %221 = vmatprep.subr.mxu0 0.0
  %222 = vmatpush1.msra.mxu0 0.0
  %223 = vmatprep.mubr.f32.mxu0 0.0
  %224 = vmatmul.mubr.f32.gmra.mrb[0].mxu0 %v112
  %v225 = vpop.f32.mrb[0].mxu0
  %v226 = vadd.f32 %v73, %v225
  %v227 = vpop.f32.mrb[0].mxu0
  %v228 = vadd.f32 %v77, %v227
  %229 = vmatprep.mubr.f32.mxu0 0.0
  %230 = vmatmul.mubr.f32.gmra.mrb[0].mxu0 %v115
  %v231 = vpop.f32.mrb[0].mxu0
  %v232 = vadd.f32 %v73, %v231
  %v233 = vpop.f32.mrb[0].mxu0
  %v234 = vadd.f32 %v77, %v233
  %235 = vmatprep.mubr.f32.mxu0 0.0
  %236 = vmatmul.mubr.f32.gmra.mrb[0].mxu0 %v118
  %v237 = vpop.f32.mrb[0].mxu0
  %v238 = vadd.f32 %v73, %v237
  %v239 = vpop.f32.mrb[0].mxu0
  %v240 = vadd.f32 %v77, %v239
  %241 = vmatprep.mubr.f32.mxu0 0.0
  %242 = vmatmul.mubr.f32.gmra.mrb[0].mxu0 %v121
  %v243 = vpop.f32.mrb[0].mxu0
  %v244 = vadd.f32 %v73, %v243
  %v245 = vpop.f32.mrb[0].mxu0
  %v246 = vadd.f32 %v77, %v245
  %247 = vmatprep.mubr.f32.mxu0 0.0
  %248 = vmatmul.mubr.f32.gmra.mrb[0].mxu0 %v124
  %v249 = vpop.f32.mrb[0].mxu0
  %v250 = vadd.f32 %v73, %v249
  %v251 = vpop.f32.mrb[0].mxu0
  %v252 = vadd.f32 %v77, %v251
  %253 = vmatprep.mubr.f32.mxu0 0.0
  %254 = vmatmul.mubr.f32.gmra.mrb[0].mxu0 %v127
  %v255 = vpop.f32.mrb[0].mxu0
  %v256 = vadd.f32 %v73, %v255
  %v257 = vpop.f32.mrb[0].mxu0
  %v258 = vadd.f32 %v77, %v257
  %259 = vmatprep.mubr.f32.mxu0 0.0
  %260 = vmatmul.mubr.f32.gmra.mrb[0].mxu0 %v130
  %v261 = vpop.f32.mrb[0].mxu0
  %v262 = vadd.f32 %v73, %v261
  %v263 = vpop.f32.mrb[0].mxu0
  %v264 = vadd.f32 %v77, %v263
  %265 = vmatprep.mubr.f32.mxu0 0.0
  %266 = vmatmul.mubr.f32.gmra.mrb[0].mxu0 %v133
  %v267 = vpop.f32.mrb[0].mxu0
  %v268 = vadd.f32 %v73, %v267
  %v269 = vpop.f32.mrb[0].mxu0
  %v270 = vadd.f32 %v77, %v269
  %271 = vmatprep.mubr.f32.mxu0 0.0
  %272 = vmatmul.mubr.f32.gmra.mrb[0].mxu0 %v136
  %v273 = vpop.f32.mrb[0].mxu0
  %v274 = vadd.f32 %v73, %v273
  %v275 = vpop.f32.mrb[0].mxu0
  %v276 = vadd.f32 %v77, %v275
  %277 = vmatprep.mubr.f32.mxu0 0.0
  %278 = vmatmul.mubr.f32.gmra.mrb[0].mxu0 %v139
  %v279 = vpop.f32.mrb[0].mxu0
  %v280 = vadd.f32 %v73, %v279
  %v281 = vpop.f32.mrb[0].mxu0
  %v282 = vadd.f32 %v77, %v281
  %283 = vmatprep.mubr.f32.mxu0 0.0
  %284 = vmatmul.mubr.f32.gmra.mrb[0].mxu0 %v142
  %v285 = vpop.f32.mrb[0].mxu0
  %v286 = vadd.f32 %v73, %v285
  %v287 = vpop.f32.mrb[0].mxu0
  %v288 = vadd.f32 %v77, %v287
  %289 = vmatprep.mubr.f32.mxu0 0.0
  %290 = vmatmul.mubr.f32.gmra.mrb[0].mxu0 %v145
  %v291 = vpop.f32.mrb[0].mxu0
  %v292 = vadd.f32 %v73, %v291
  %v293 = vpop.f32.mrb[0].mxu0
  %v294 = vadd.f32 %v77, %v293
  %295 = vmatprep.mubr.f32.mxu0 0.0
  %296 = vmatmul.mubr.f32.gmra.mrb[0].mxu0 %v148
  %v297 = vpop.f32.mrb[0].mxu0
  %v298 = vadd.f32 %v73, %v297
  %v299 = vpop.f32.mrb[0].mxu0
  %v300 = vadd.f32 %v77, %v299
  %301 = vmatprep.mubr.f32.mxu0 0.0
  %302 = vmatmul.mubr.f32.gmra.mrb[0].mxu0 %v151
  %v303 = vpop.f32.mrb[0].mxu0
  %v304 = vadd.f32 %v73, %v303
  %v305 = vpop.f32.mrb[0].mxu0
  %v306 = vadd.f32 %v77, %v305
  %307 = vmatprep.mubr.f32.mxu0 0.0
  %308 = vmatmul.mubr.f32.gmra.mrb[0].mxu0 %v154
  %v309 = vpop.f32.mrb[0].mxu0
  %v310 = vadd.f32 %v73, %v309
  %v311 = vpop.f32.mrb[0].mxu0
  %v312 = vadd.f32 %v77, %v311
  %313 = vmatprep.mubr.f32.mxu0 0.0
  %314 = vmatmul.mubr.f32.gmra.mrb[0].mxu0 %v157
  %v315 = vpop.f32.mrb[0].mxu0
  %v316 = vadd.f32 %v73, %v315
  %v317 = vpop.f32.mrb[0].mxu0
  %v318 = vadd.f32 %v77, %v317
  %319 = vdwg.mxu0
  %320 = vmatprep.subr.mxu0 %v39
  %321 = vmatpush1.msra.mxu0 %v38
  %322 = vmatprep.subr.mxu0 %v47
  %323 = vmatpush1.msra.mxu0 %v46
  %324 = vmatprep.subr.mxu0 %v55
  %325 = vmatpush1.msra.mxu0 %v54
  %326 = vmatprep.subr.mxu0 %v63
  %327 = vmatpush1.msra.mxu0 %v62
  %328 = vmatprep.subr.mxu0 0.0
  %329 = vmatpush1.msra.mxu0 0.0
  %330 = vmatprep.subr.mxu0 0.0
  %331 = vmatpush1.msra.mxu0 0.0
  %332 = vmatprep.subr.mxu0 0.0
  %333 = vmatpush1.msra.mxu0 0.0
  %334 = vmatprep.subr.mxu0 0.0
  %335 = vmatpush1.msra.mxu0 0.0
  %336 = vmatprep.subr.mxu0 0.0
  %337 = vmatpush1.msra.mxu0 0.0
  %338 = vmatprep.subr.mxu0 0.0
  %339 = vmatpush1.msra.mxu0 0.0
  %340 = vmatprep.subr.mxu0 0.0
  %341 = vmatpush1.msra.mxu0 0.0
  %342 = vmatprep.subr.mxu0 0.0
  %343 = vmatpush1.msra.mxu0 0.0
  %344 = vmatprep.subr.mxu0 0.0
  %345 = vmatpush1.msra.mxu0 0.0
  %346 = vmatprep.subr.mxu0 0.0
  %347 = vmatpush1.msra.mxu0 0.0
  %348 = vmatprep.subr.mxu0 0.0
  %349 = vmatpush1.msra.mxu0 0.0
  %350 = vmatprep.subr.mxu0 0.0
  %351 = vmatpush1.msra.mxu0 0.0
  %352 = vmatprep.subr.mxu0 0.0
  %353 = vmatpush1.msra.mxu0 0.0
  %354 = vmatprep.subr.mxu0 0.0
  %355 = vmatpush1.msra.mxu0 0.0
  %356 = vmatprep.subr.mxu0 0.0
  %357 = vmatpush1.msra.mxu0 0.0
  %358 = vmatprep.subr.mxu0 0.0
  %359 = vmatpush1.msra.mxu0 0.0
  %360 = vmatprep.subr.mxu0 0.0
  %361 = vmatpush1.msra.mxu0 0.0
  %362 = vmatprep.subr.mxu0 0.0
  %363 = vmatpush1.msra.mxu0 0.0
  %364 = vmatprep.subr.mxu0 0.0
  %365 = vmatpush1.msra.mxu0 0.0
  %366 = vmatprep.subr.mxu0 0.0
  %367 = vmatpush1.msra.mxu0 0.0
  %368 = vmatprep.subr.mxu0 0.0
  %369 = vmatpush1.msra.mxu0 0.0
  %370 = vmatprep.subr.mxu0 0.0
  %371 = vmatpush1.msra.mxu0 0.0
  %372 = vmatprep.subr.mxu0 0.0
  %373 = vmatpush1.msra.mxu0 0.0
  %374 = vmatprep.subr.mxu0 0.0
  %375 = vmatpush1.msra.mxu0 0.0
  %376 = vmatprep.subr.mxu0 0.0
  %377 = vmatpush1.msra.mxu0 0.0
  %378 = vmatprep.subr.mxu0 0.0
  %379 = vmatpush1.msra.mxu0 0.0
  %380 = vmatprep.subr.mxu0 0.0
  %381 = vmatpush1.msra.mxu0 0.0
  %382 = vmatprep.subr.mxu0 0.0
  %383 = vmatpush1.msra.mxu0 0.0
  %384 = vmatprep.mubr.f32.mxu0 0.0
  %385 = vmatmul.mubr.f32.gmra.mrb[0].mxu0 %v112
  %v386 = vpop.f32.mrb[0].mxu0
  %v387 = vadd.f32 %v81, %v386
  %v388 = vpop.f32.mrb[0].mxu0
  %v389 = vadd.f32 %v85, %v388
  %390 = vmatprep.mubr.f32.mxu0 0.0
  %391 = vmatmul.mubr.f32.gmra.mrb[0].mxu0 %v115
  %v392 = vpop.f32.mrb[0].mxu0
  %v393 = vadd.f32 %v81, %v392
  %v394 = vpop.f32.mrb[0].mxu0
  %v395 = vadd.f32 %v85, %v394
  %396 = vmatprep.mubr.f32.mxu0 0.0
  %397 = vmatmul.mubr.f32.gmra.mrb[0].mxu0 %v118
  %v398 = vpop.f32.mrb[0].mxu0
  %v399 = vadd.f32 %v81, %v398
  %v400 = vpop.f32.mrb[0].mxu0
  %v401 = vadd.f32 %v85, %v400
  %402 = vmatprep.mubr.f32.mxu0 0.0
  %403 = vmatmul.mubr.f32.gmra.mrb[0].mxu0 %v121
  %v404 = vpop.f32.mrb[0].mxu0
  %v405 = vadd.f32 %v81, %v404
  %v406 = vpop.f32.mrb[0].mxu0
  %v407 = vadd.f32 %v85, %v406
  %408 = vmatprep.mubr.f32.mxu0 0.0
  %409 = vmatmul.mubr.f32.gmra.mrb[0].mxu0 %v124
  %v410 = vpop.f32.mrb[0].mxu0
  %v411 = vadd.f32 %v81, %v410
  %v412 = vpop.f32.mrb[0].mxu0
  %v413 = vadd.f32 %v85, %v412
  %414 = vmatprep.mubr.f32.mxu0 0.0
  %415 = vmatmul.mubr.f32.gmra.mrb[0].mxu0 %v127
  %v416 = vpop.f32.mrb[0].mxu0
  %v417 = vadd.f32 %v81, %v416
  %v418 = vpop.f32.mrb[0].mxu0
  %v419 = vadd.f32 %v85, %v418
  %420 = vmatprep.mubr.f32.mxu0 0.0
  %421 = vmatmul.mubr.f32.gmra.mrb[0].mxu0 %v130
  %v422 = vpop.f32.mrb[0].mxu0
  %v423 = vadd.f32 %v81, %v422
  %v424 = vpop.f32.mrb[0].mxu0
  %v425 = vadd.f32 %v85, %v424
  %426 = vmatprep.mubr.f32.mxu0 0.0
  %427 = vmatmul.mubr.f32.gmra.mrb[0].mxu0 %v133
  %v428 = vpop.f32.mrb[0].mxu0
  %v429 = vadd.f32 %v81, %v428
  %v430 = vpop.f32.mrb[0].mxu0
  %v431 = vadd.f32 %v85, %v430
  %432 = vmatprep.mubr.f32.mxu0 0.0
  %433 = vmatmul.mubr.f32.gmra.mrb[0].mxu0 %v136
  %v434 = vpop.f32.mrb[0].mxu0
  %v435 = vadd.f32 %v81, %v434
  %v436 = vpop.f32.mrb[0].mxu0
  %v437 = vadd.f32 %v85, %v436
  %438 = vmatprep.mubr.f32.mxu0 0.0
  %439 = vmatmul.mubr.f32.gmra.mrb[0].mxu0 %v139
  %v440 = vpop.f32.mrb[0].mxu0
  %v441 = vadd.f32 %v81, %v440
  %v442 = vpop.f32.mrb[0].mxu0
  %v443 = vadd.f32 %v85, %v442
  %444 = vmatprep.mubr.f32.mxu0 0.0
  %445 = vmatmul.mubr.f32.gmra.mrb[0].mxu0 %v142
  %v446 = vpop.f32.mrb[0].mxu0
  %v447 = vadd.f32 %v81, %v446
  %v448 = vpop.f32.mrb[0].mxu0
  %v449 = vadd.f32 %v85, %v448
  %450 = vmatprep.mubr.f32.mxu0 0.0
  %451 = vmatmul.mubr.f32.gmra.mrb[0].mxu0 %v145
  %v452 = vpop.f32.mrb[0].mxu0
  %v453 = vadd.f32 %v81, %v452
  %v454 = vpop.f32.mrb[0].mxu0
  %v455 = vadd.f32 %v85, %v454
  %456 = vmatprep.mubr.f32.mxu0 0.0
  %457 = vmatmul.mubr.f32.gmra.mrb[0].mxu0 %v148
  %v458 = vpop.f32.mrb[0].mxu0
  %v459 = vadd.f32 %v81, %v458
  %v460 = vpop.f32.mrb[0].mxu0
  %v461 = vadd.f32 %v85, %v460
  %462 = vmatprep.mubr.f32.mxu0 0.0
  %463 = vmatmul.mubr.f32.gmra.mrb[0].mxu0 %v151
  %v464 = vpop.f32.mrb[0].mxu0
  %v465 = vadd.f32 %v81, %v464
  %v466 = vpop.f32.mrb[0].mxu0
  %v467 = vadd.f32 %v85, %v466
  %468 = vmatprep.mubr.f32.mxu0 0.0
  %469 = vmatmul.mubr.f32.gmra.mrb[0].mxu0 %v154
  %v470 = vpop.f32.mrb[0].mxu0
  %v471 = vadd.f32 %v81, %v470
  %v472 = vpop.f32.mrb[0].mxu0
  %v473 = vadd.f32 %v85, %v472
  %474 = vmatprep.mubr.f32.mxu0 0.0
  %475 = vmatmul.mubr.f32.gmra.mrb[0].mxu0 %v157
  %v476 = vpop.f32.mrb[0].mxu0
  %v477 = vadd.f32 %v81, %v476
  %v478 = vpop.f32.mrb[0].mxu0
  %v479 = vadd.f32 %v85, %v478
  %480 = vdwg.mxu0
  %481 = vmatprep.subr.mxu0 %v41
  %482 = vmatpush1.msra.mxu0 %v40
  %483 = vmatprep.subr.mxu0 %v49
  %484 = vmatpush1.msra.mxu0 %v48
  %485 = vmatprep.subr.mxu0 %v57
  %486 = vmatpush1.msra.mxu0 %v56
  %487 = vmatprep.subr.mxu0 %v65
  %488 = vmatpush1.msra.mxu0 %v64
  %489 = vmatprep.subr.mxu0 0.0
  %490 = vmatpush1.msra.mxu0 0.0
  %491 = vmatprep.subr.mxu0 0.0
  %492 = vmatpush1.msra.mxu0 0.0
  %493 = vmatprep.subr.mxu0 0.0
  %494 = vmatpush1.msra.mxu0 0.0
  %495 = vmatprep.subr.mxu0 0.0
  %496 = vmatpush1.msra.mxu0 0.0
  %497 = vmatprep.subr.mxu0 0.0
  %498 = vmatpush1.msra.mxu0 0.0
  %499 = vmatprep.subr.mxu0 0.0
  %500 = vmatpush1.msra.mxu0 0.0
  %501 = vmatprep.subr.mxu0 0.0
  %502 = vmatpush1.msra.mxu0 0.0
  %503 = vmatprep.subr.mxu0 0.0
  %504 = vmatpush1.msra.mxu0 0.0
  %505 = vmatprep.subr.mxu0 0.0
  %506 = vmatpush1.msra.mxu0 0.0
  %507 = vmatprep.subr.mxu0 0.0
  %508 = vmatpush1.msra.mxu0 0.0
  %509 = vmatprep.subr.mxu0 0.0
  %510 = vmatpush1.msra.mxu0 0.0
  %511 = vmatprep.subr.mxu0 0.0
  %512 = vmatpush1.msra.mxu0 0.0
  %513 = vmatprep.subr.mxu0 0.0
  %514 = vmatpush1.msra.mxu0 0.0
  %515 = vmatprep.subr.mxu0 0.0
  %516 = vmatpush1.msra.mxu0 0.0
  %517 = vmatprep.subr.mxu0 0.0
  %518 = vmatpush1.msra.mxu0 0.0
  %519 = vmatprep.subr.mxu0 0.0
  %520 = vmatpush1.msra.mxu0 0.0
  %521 = vmatprep.subr.mxu0 0.0
  %522 = vmatpush1.msra.mxu0 0.0
  %523 = vmatprep.subr.mxu0 0.0
  %524 = vmatpush1.msra.mxu0 0.0
  %525 = vmatprep.subr.mxu0 0.0
  %526 = vmatpush1.msra.mxu0 0.0
  %527 = vmatprep.subr.mxu0 0.0
  %528 = vmatpush1.msra.mxu0 0.0
  %529 = vmatprep.subr.mxu0 0.0
  %530 = vmatpush1.msra.mxu0 0.0
  %531 = vmatprep.subr.mxu0 0.0
  %532 = vmatpush1.msra.mxu0 0.0
  %533 = vmatprep.subr.mxu0 0.0
  %534 = vmatpush1.msra.mxu0 0.0
  %535 = vmatprep.subr.mxu0 0.0
  %536 = vmatpush1.msra.mxu0 0.0
  %537 = vmatprep.subr.mxu0 0.0
  %538 = vmatpush1.msra.mxu0 0.0
  %539 = vmatprep.subr.mxu0 0.0
  %540 = vmatpush1.msra.mxu0 0.0
  %541 = vmatprep.subr.mxu0 0.0
  %542 = vmatpush1.msra.mxu0 0.0
  %543 = vmatprep.subr.mxu0 0.0
  %544 = vmatpush1.msra.mxu0 0.0
  %545 = vmatprep.mubr.f32.mxu0 0.0
  %546 = vmatmul.mubr.f32.gmra.mrb[0].mxu0 %v112
  %v547 = vpop.f32.mrb[0].mxu0
  %v548 = vadd.f32 %v89, %v547
  %v549 = vpop.f32.mrb[0].mxu0
  %v550 = vadd.f32 %v93, %v549
  %551 = vmatprep.mubr.f32.mxu0 0.0
  %552 = vmatmul.mubr.f32.gmra.mrb[0].mxu0 %v115
  %v553 = vpop.f32.mrb[0].mxu0
  %v554 = vadd.f32 %v89, %v553
  %v555 = vpop.f32.mrb[0].mxu0
  %v556 = vadd.f32 %v93, %v555
  %557 = vmatprep.mubr.f32.mxu0 0.0
  %558 = vmatmul.mubr.f32.gmra.mrb[0].mxu0 %v118
  %v559 = vpop.f32.mrb[0].mxu0
  %v560 = vadd.f32 %v89, %v559
  %v561 = vpop.f32.mrb[0].mxu0
  %v562 = vadd.f32 %v93, %v561
  %563 = vmatprep.mubr.f32.mxu0 0.0
  %564 = vmatmul.mubr.f32.gmra.mrb[0].mxu0 %v121
  %v565 = vpop.f32.mrb[0].mxu0
  %v566 = vadd.f32 %v89, %v565
  %v567 = vpop.f32.mrb[0].mxu0
  %v568 = vadd.f32 %v93, %v567
  %569 = vmatprep.mubr.f32.mxu0 0.0
  %570 = vmatmul.mubr.f32.gmra.mrb[0].mxu0 %v124
  %v571 = vpop.f32.mrb[0].mxu0
  %v572 = vadd.f32 %v89, %v571
  %v573 = vpop.f32.mrb[0].mxu0
  %v574 = vadd.f32 %v93, %v573
  %575 = vmatprep.mubr.f32.mxu0 0.0
  %576 = vmatmul.mubr.f32.gmra.mrb[0].mxu0 %v127
  %v577 = vpop.f32.mrb[0].mxu0
  %v578 = vadd.f32 %v89, %v577
  %v579 = vpop.f32.mrb[0].mxu0
  %v580 = vadd.f32 %v93, %v579
  %581 = vmatprep.mubr.f32.mxu0 0.0
  %582 = vmatmul.mubr.f32.gmra.mrb[0].mxu0 %v130
  %v583 = vpop.f32.mrb[0].mxu0
  %v584 = vadd.f32 %v89, %v583
  %v585 = vpop.f32.mrb[0].mxu0
  %v586 = vadd.f32 %v93, %v585
  %587 = vmatprep.mubr.f32.mxu0 0.0
  %588 = vmatmul.mubr.f32.gmra.mrb[0].mxu0 %v133
  %v589 = vpop.f32.mrb[0].mxu0
  %v590 = vadd.f32 %v89, %v589
  %v591 = vpop.f32.mrb[0].mxu0
  %v592 = vadd.f32 %v93, %v591
  %593 = vmatprep.mubr.f32.mxu0 0.0
  %594 = vmatmul.mubr.f32.gmra.mrb[0].mxu0 %v136
  %v595 = vpop.f32.mrb[0].mxu0
  %v596 = vadd.f32 %v89, %v595
  %v597 = vpop.f32.mrb[0].mxu0
  %v598 = vadd.f32 %v93, %v597
  %599 = vmatprep.mubr.f32.mxu0 0.0
  %600 = vmatmul.mubr.f32.gmra.mrb[0].mxu0 %v139
  %v601 = vpop.f32.mrb[0].mxu0
  %v602 = vadd.f32 %v89, %v601
  %v603 = vpop.f32.mrb[0].mxu0
  %v604 = vadd.f32 %v93, %v603
  %605 = vmatprep.mubr.f32.mxu0 0.0
  %606 = vmatmul.mubr.f32.gmra.mrb[0].mxu0 %v142
  %v607 = vpop.f32.mrb[0].mxu0
  %v608 = vadd.f32 %v89, %v607
  %v609 = vpop.f32.mrb[0].mxu0
  %v610 = vadd.f32 %v93, %v609
  %611 = vmatprep.mubr.f32.mxu0 0.0
  %612 = vmatmul.mubr.f32.gmra.mrb[0].mxu0 %v145
  %v613 = vpop.f32.mrb[0].mxu0
  %v614 = vadd.f32 %v89, %v613
  %v615 = vpop.f32.mrb[0].mxu0
  %v616 = vadd.f32 %v93, %v615
  %617 = vmatprep.mubr.f32.mxu0 0.0
  %618 = vmatmul.mubr.f32.gmra.mrb[0].mxu0 %v148
  %v619 = vpop.f32.mrb[0].mxu0
  %v620 = vadd.f32 %v89, %v619
  %v621 = vpop.f32.mrb[0].mxu0
  %v622 = vadd.f32 %v93, %v621
  %623 = vmatprep.mubr.f32.mxu0 0.0
  %624 = vmatmul.mubr.f32.gmra.mrb[0].mxu0 %v151
  %v625 = vpop.f32.mrb[0].mxu0
  %v626 = vadd.f32 %v89, %v625
  %v627 = vpop.f32.mrb[0].mxu0
  %v628 = vadd.f32 %v93, %v627
  %629 = vmatprep.mubr.f32.mxu0 0.0
  %630 = vmatmul.mubr.f32.gmra.mrb[0].mxu0 %v154
  %v631 = vpop.f32.mrb[0].mxu0
  %v632 = vadd.f32 %v89, %v631
  %v633 = vpop.f32.mrb[0].mxu0
  %v634 = vadd.f32 %v93, %v633
  %635 = vmatprep.mubr.f32.mxu0 0.0
  %636 = vmatmul.mubr.f32.gmra.mrb[0].mxu0 %v157
  %v637 = vpop.f32.mrb[0].mxu0
  %v638 = vadd.f32 %v89, %v637
  %v639 = vpop.f32.mrb[0].mxu0
  %v640 = vadd.f32 %v93, %v639
  %641 = vdwg.mxu0
  %642 = vmatprep.subr.mxu0 %v43
  %643 = vmatpush1.msra.mxu0 %v42
  %644 = vmatprep.subr.mxu0 %v51
  %645 = vmatpush1.msra.mxu0 %v50
  %646 = vmatprep.subr.mxu0 %v59
  %647 = vmatpush1.msra.mxu0 %v58
  %648 = vmatprep.subr.mxu0 %v67
  %649 = vmatpush1.msra.mxu0 %v66
  %650 = vmatprep.subr.mxu0 0.0
  %651 = vmatpush1.msra.mxu0 0.0
  %652 = vmatprep.subr.mxu0 0.0
  %653 = vmatpush1.msra.mxu0 0.0
  %654 = vmatprep.subr.mxu0 0.0
  %655 = vmatpush1.msra.mxu0 0.0
  %656 = vmatprep.subr.mxu0 0.0
  %657 = vmatpush1.msra.mxu0 0.0
  %658 = vmatprep.subr.mxu0 0.0
  %659 = vmatpush1.msra.mxu0 0.0
  %660 = vmatprep.subr.mxu0 0.0
  %661 = vmatpush1.msra.mxu0 0.0
  %662 = vmatprep.subr.mxu0 0.0
  %663 = vmatpush1.msra.mxu0 0.0
  %664 = vmatprep.subr.mxu0 0.0
  %665 = vmatpush1.msra.mxu0 0.0
  %666 = vmatprep.subr.mxu0 0.0
  %667 = vmatpush1.msra.mxu0 0.0
  %668 = vmatprep.subr.mxu0 0.0
  %669 = vmatpush1.msra.mxu0 0.0
  %670 = vmatprep.subr.mxu0 0.0
  %671 = vmatpush1.msra.mxu0 0.0
  %672 = vmatprep.subr.mxu0 0.0
  %673 = vmatpush1.msra.mxu0 0.0
  %674 = vmatprep.subr.mxu0 0.0
  %675 = vmatpush1.msra.mxu0 0.0
  %676 = vmatprep.subr.mxu0 0.0
  %677 = vmatpush1.msra.mxu0 0.0
  %678 = vmatprep.subr.mxu0 0.0
  %679 = vmatpush1.msra.mxu0 0.0
  %680 = vmatprep.subr.mxu0 0.0
  %681 = vmatpush1.msra.mxu0 0.0
  %682 = vmatprep.subr.mxu0 0.0
  %683 = vmatpush1.msra.mxu0 0.0
  %684 = vmatprep.subr.mxu0 0.0
  %685 = vmatpush1.msra.mxu0 0.0
  %686 = vmatprep.subr.mxu0 0.0
  %687 = vmatpush1.msra.mxu0 0.0
  %688 = vmatprep.subr.mxu0 0.0
  %689 = vmatpush1.msra.mxu0 0.0
  %690 = vmatprep.subr.mxu0 0.0
  %691 = vmatpush1.msra.mxu0 0.0
  %692 = vmatprep.subr.mxu0 0.0
  %693 = vmatpush1.msra.mxu0 0.0
  %694 = vmatprep.subr.mxu0 0.0
  %695 = vmatpush1.msra.mxu0 0.0
  %696 = vmatprep.subr.mxu0 0.0
  %697 = vmatpush1.msra.mxu0 0.0
  %698 = vmatprep.subr.mxu0 0.0
  %699 = vmatpush1.msra.mxu0 0.0
  %700 = vmatprep.subr.mxu0 0.0
  %701 = vmatpush1.msra.mxu0 0.0
  %702 = vmatprep.subr.mxu0 0.0
  %703 = vmatpush1.msra.mxu0 0.0
  %704 = vmatprep.subr.mxu0 0.0
  %705 = vmatpush1.msra.mxu0 0.0
  %706 = vmatprep.mubr.f32.mxu0 0.0
  %707 = vmatmul.mubr.f32.gmra.mrb[0].mxu0 %v112
  %v708 = vpop.f32.mrb[0].mxu0
  %v709 = vadd.f32 %v97, %v708
  %v710 = vpop.f32.mrb[0].mxu0
  %v711 = vadd.f32 %v101, %v710
  %712 = vmatprep.mubr.f32.mxu0 0.0
  %713 = vmatmul.mubr.f32.gmra.mrb[0].mxu0 %v115
  %v714 = vpop.f32.mrb[0].mxu0
  %v715 = vadd.f32 %v97, %v714
  %v716 = vpop.f32.mrb[0].mxu0
  %v717 = vadd.f32 %v101, %v716
  %718 = vmatprep.mubr.f32.mxu0 0.0
  %719 = vmatmul.mubr.f32.gmra.mrb[0].mxu0 %v118
  %v720 = vpop.f32.mrb[0].mxu0
  %v721 = vadd.f32 %v97, %v720
  %v722 = vpop.f32.mrb[0].mxu0
  %v723 = vadd.f32 %v101, %v722
  %724 = vmatprep.mubr.f32.mxu0 0.0
  %725 = vmatmul.mubr.f32.gmra.mrb[0].mxu0 %v121
  %v726 = vpop.f32.mrb[0].mxu0
  %v727 = vadd.f32 %v97, %v726
  %v728 = vpop.f32.mrb[0].mxu0
  %v729 = vadd.f32 %v101, %v728
  %730 = vmatprep.mubr.f32.mxu0 0.0
  %731 = vmatmul.mubr.f32.gmra.mrb[0].mxu0 %v124
  %v732 = vpop.f32.mrb[0].mxu0
  %v733 = vadd.f32 %v97, %v732
  %v734 = vpop.f32.mrb[0].mxu0
  %v735 = vadd.f32 %v101, %v734
  %736 = vmatprep.mubr.f32.mxu0 0.0
  %737 = vmatmul.mubr.f32.gmra.mrb[0].mxu0 %v127
  %v738 = vpop.f32.mrb[0].mxu0
  %v739 = vadd.f32 %v97, %v738
  %v740 = vpop.f32.mrb[0].mxu0
  %v741 = vadd.f32 %v101, %v740
  %742 = vmatprep.mubr.f32.mxu0 0.0
  %743 = vmatmul.mubr.f32.gmra.mrb[0].mxu0 %v130
  %v744 = vpop.f32.mrb[0].mxu0
  %v745 = vadd.f32 %v97, %v744
  %v746 = vpop.f32.mrb[0].mxu0
  %v747 = vadd.f32 %v101, %v746
  %748 = vmatprep.mubr.f32.mxu0 0.0
  %749 = vmatmul.mubr.f32.gmra.mrb[0].mxu0 %v133
  %v750 = vpop.f32.mrb[0].mxu0
  %v751 = vadd.f32 %v97, %v750
  %v752 = vpop.f32.mrb[0].mxu0
  %v753 = vadd.f32 %v101, %v752
  %754 = vmatprep.mubr.f32.mxu0 0.0
  %755 = vmatmul.mubr.f32.gmra.mrb[0].mxu0 %v136
  %v756 = vpop.f32.mrb[0].mxu0
  %v757 = vadd.f32 %v97, %v756
  %v758 = vpop.f32.mrb[0].mxu0
  %v759 = vadd.f32 %v101, %v758
  %760 = vmatprep.mubr.f32.mxu0 0.0
  %761 = vmatmul.mubr.f32.gmra.mrb[0].mxu0 %v139
  %v762 = vpop.f32.mrb[0].mxu0
  %v763 = vadd.f32 %v97, %v762
  %v764 = vpop.f32.mrb[0].mxu0
  %v765 = vadd.f32 %v101, %v764
  %766 = vmatprep.mubr.f32.mxu0 0.0
  %767 = vmatmul.mubr.f32.gmra.mrb[0].mxu0 %v142
  %v768 = vpop.f32.mrb[0].mxu0
  %v769 = vadd.f32 %v97, %v768
  %v770 = vpop.f32.mrb[0].mxu0
  %v771 = vadd.f32 %v101, %v770
  %772 = vmatprep.mubr.f32.mxu0 0.0
  %773 = vmatmul.mubr.f32.gmra.mrb[0].mxu0 %v145
  %v774 = vpop.f32.mrb[0].mxu0
  %v775 = vadd.f32 %v97, %v774
  %v776 = vpop.f32.mrb[0].mxu0
  %v777 = vadd.f32 %v101, %v776
  %778 = vmatprep.mubr.f32.mxu0 0.0
  %779 = vmatmul.mubr.f32.gmra.mrb[0].mxu0 %v148
  %v780 = vpop.f32.mrb[0].mxu0
  %v781 = vadd.f32 %v97, %v780
  %v782 = vpop.f32.mrb[0].mxu0
  %v783 = vadd.f32 %v101, %v782
  %784 = vmatprep.mubr.f32.mxu0 0.0
  %785 = vmatmul.mubr.f32.gmra.mrb[0].mxu0 %v151
  %v786 = vpop.f32.mrb[0].mxu0
  %v787 = vadd.f32 %v97, %v786
  %v788 = vpop.f32.mrb[0].mxu0
  %v789 = vadd.f32 %v101, %v788
  %790 = vmatprep.mubr.f32.mxu0 0.0
  %791 = vmatmul.mubr.f32.gmra.mrb[0].mxu0 %v154
  %v792 = vpop.f32.mrb[0].mxu0
  %v793 = vadd.f32 %v97, %v792
  %v794 = vpop.f32.mrb[0].mxu0
  %v795 = vadd.f32 %v101, %v794
  %796 = vmatprep.mubr.f32.mxu0 0.0
  %797 = vmatmul.mubr.f32.gmra.mrb[0].mxu0 %v157
  %v798 = vpop.f32.mrb[0].mxu0
  %v799 = vadd.f32 %v97, %v798
  %v800 = vpop.f32.mrb[0].mxu0
  %v801 = vadd.f32 %v101, %v800
  %802 = vdwg.mxu0
  %v803 = vld [vmem:[%s3] sm:$0xff]
  %v804 = vld [vmem:[%s3 + $0x8] sm:$0xff]
  %v805 = vld [vmem:[%s3 + $0x10] sm:$0xff]
  %v806 = vld [vmem:[%s3 + $0x18] sm:$0xff]
  %v807 = vld [vmem:[%s3 + $0x20] sm:$0xff]
  %v808 = vld [vmem:[%s3 + $0x28] sm:$0xff]
  %v809 = vld [vmem:[%s3 + $0x30] sm:$0xff]
  %v810 = vld [vmem:[%s3 + $0x38] sm:$0xff]
  %v811 = vld [vmem:[%s3 + $0x40] sm:$0xff]
  %v812 = vld [vmem:[%s3 + $0x48] sm:$0xff]
  %v813 = vld [vmem:[%s3 + $0x50] sm:$0xff]
  %v814 = vld [vmem:[%s3 + $0x58] sm:$0xff]
  %v815 = vld [vmem:[%s3 + $0x60] sm:$0xff]
  %v816 = vld [vmem:[%s3 + $0x68] sm:$0xff]
  %v817 = vld [vmem:[%s3 + $0x70] sm:$0xff]
  %v818 = vld [vmem:[%s3 + $0x78] sm:$0xff]
  %v819 = vld [vmem:[%s3 + $0x80] sm:$0xff]
  %v820 = vld [vmem:[%s3 + $0x88] sm:$0xff]
  %v821 = vld [vmem:[%s3 + $0x90] sm:$0xff]
  %v822 = vld [vmem:[%s3 + $0x98] sm:$0xff]
  %v823 = vld [vmem:[%s3 + $0xa0] sm:$0xff]
  %v824 = vld [vmem:[%s3 + $0xa8] sm:$0xff]
  %v825 = vld [vmem:[%s3 + $0xb0] sm:$0xff]
  %v826 = vld [vmem:[%s3 + $0xb8] sm:$0xff]
  %v827 = vld [vmem:[%s3 + $0xc0] sm:$0xff]
  %v828 = vld [vmem:[%s3 + $0xc8] sm:$0xff]
  %v829 = vld [vmem:[%s3 + $0xd0] sm:$0xff]
  %v830 = vld [vmem:[%s3 + $0xd8] sm:$0xff]
  %v831 = vld [vmem:[%s3 + $0xe0] sm:$0xff]
  %v832 = vld [vmem:[%s3 + $0xe8] sm:$0xff]
  %v833 = vld [vmem:[%s3 + $0xf0] sm:$0xff]
  %v834 = vld [vmem:[%s3 + $0xf8] sm:$0xff]
  %v835 = vld [vmem:[%s3 + $0x100] sm:$0xff]
  %v836 = vld [vmem:[%s3 + $0x108] sm:$0xff]
  %v837 = vld [vmem:[%s3 + $0x110] sm:$0xff]
  %v838 = vld [vmem:[%s3 + $0x118] sm:$0xff]
  %v839 = vld [vmem:[%s3 + $0x120] sm:$0xff]
  %v840 = vld [vmem:[%s3 + $0x128] sm:$0xff]
  %v841 = vld [vmem:[%s3 + $0x130] sm:$0xff]
  %v842 = vld [vmem:[%s3 + $0x138] sm:$0xff]
  %v843 = vld [vmem:[%s3 + $0x140] sm:$0xff]
  %v844 = vld [vmem:[%s3 + $0x148] sm:$0xff]
  %v845 = vld [vmem:[%s3 + $0x150] sm:$0xff]
  %v846 = vld [vmem:[%s3 + $0x158] sm:$0xff]
  %v847 = vld [vmem:[%s3 + $0x160] sm:$0xff]
  %v848 = vld [vmem:[%s3 + $0x168] sm:$0xff]
  %v849 = vld [vmem:[%s3 + $0x170] sm:$0xff]
  %v850 = vld [vmem:[%s3 + $0x178] sm:$0xff]
  %v851 = vld [vmem:[%s3 + $0x180] sm:$0xff]
  %v852 = vld [vmem:[%s3 + $0x188] sm:$0xff]
  %v853 = vld [vmem:[%s3 + $0x190] sm:$0xff]
  %v854 = vld [vmem:[%s3 + $0x198] sm:$0xff]
  %v855 = vld [vmem:[%s3 + $0x1a0] sm:$0xff]
  %v856 = vld [vmem:[%s3 + $0x1a8] sm:$0xff]
  %v857 = vld [vmem:[%s3 + $0x1b0] sm:$0xff]
  %v858 = vld [vmem:[%s3 + $0x1b8] sm:$0xff]
  %v859 = vld [vmem:[%s3 + $0x1c0] sm:$0xff]
  %v860 = vld [vmem:[%s3 + $0x1c8] sm:$0xff]
  %v861 = vld [vmem:[%s3 + $0x1d0] sm:$0xff]
  %v862 = vld [vmem:[%s3 + $0x1d8] sm:$0xff]
  %v863 = vld [vmem:[%s3 + $0x1e0] sm:$0xff]
  %v864 = vld [vmem:[%s3 + $0x1e8] sm:$0xff]
  %v865 = vld [vmem:[%s3 + $0x1f0] sm:$0xff]
  %v866 = vld [vmem:[%s3 + $0x1f8] sm:$0xff]
  %v867 = vld [vmem:[%s3 + $0x200] sm:$0xff]
  %v868 = vld [vmem:[%s3 + $0x208] sm:$0xff]
  %v869 = vld [vmem:[%s3 + $0x210] sm:$0xff]
  %v870 = vld [vmem:[%s3 + $0x218] sm:$0xff]
  %v871 = vld [vmem:[%s3 + $0x220] sm:$0xff]
  %v872 = vld [vmem:[%s3 + $0x228] sm:$0xff]
  %v873 = vld [vmem:[%s3 + $0x230] sm:$0xff]
  %v874 = vld [vmem:[%s3 + $0x238] sm:$0xff]
  %v875 = vld [vmem:[%s3 + $0x240] sm:$0xff]
  %v876 = vld [vmem:[%s3 + $0x248] sm:$0xff]
  %v877 = vld [vmem:[%s3 + $0x250] sm:$0xff]
  %v878 = vld [vmem:[%s3 + $0x258] sm:$0xff]
  %v879 = vld [vmem:[%s3 + $0x260] sm:$0xff]
  %v880 = vld [vmem:[%s3 + $0x268] sm:$0xff]
  %v881 = vld [vmem:[%s3 + $0x270] sm:$0xff]
  %v882 = vld [vmem:[%s3 + $0x278] sm:$0xff]
  %v883 = vld [vmem:[%s3 + $0x280] sm:$0xff]
  %v884 = vld [vmem:[%s3 + $0x288] sm:$0xff]
  %v885 = vld [vmem:[%s3 + $0x290] sm:$0xff]
  %v886 = vld [vmem:[%s3 + $0x298] sm:$0xff]
  %v887 = vld [vmem:[%s3 + $0x2a0] sm:$0xff]
  %v888 = vld [vmem:[%s3 + $0x2a8] sm:$0xff]
  %v889 = vld [vmem:[%s3 + $0x2b0] sm:$0xff]
  %v890 = vld [vmem:[%s3 + $0x2b8] sm:$0xff]
  %v891 = vld [vmem:[%s3 + $0x2c0] sm:$0xff]
  %v892 = vld [vmem:[%s3 + $0x2c8] sm:$0xff]
  %v893 = vld [vmem:[%s3 + $0x2d0] sm:$0xff]
  %v894 = vld [vmem:[%s3 + $0x2d8] sm:$0xff]
  %v895 = vld [vmem:[%s3 + $0x2e0] sm:$0xff]
  %v896 = vld [vmem:[%s3 + $0x2e8] sm:$0xff]
  %v897 = vld [vmem:[%s3 + $0x2f0] sm:$0xff]
  %v898 = vld [vmem:[%s3 + $0x2f8] sm:$0xff]
  %v899 = vld [vmem:[%s3 + $0x300] sm:$0xff]
  %v900 = vld [vmem:[%s3 + $0x308] sm:$0xff]
  %v901 = vld [vmem:[%s3 + $0x310] sm:$0xff]
  %v902 = vld [vmem:[%s3 + $0x318] sm:$0xff]
  %v903 = vld [vmem:[%s3 + $0x320] sm:$0xff]
  %v904 = vld [vmem:[%s3 + $0x328] sm:$0xff]
  %v905 = vld [vmem:[%s3 + $0x330] sm:$0xff]
  %v906 = vld [vmem:[%s3 + $0x338] sm:$0xff]
  %v907 = vld [vmem:[%s3 + $0x340] sm:$0xff]
  %v908 = vld [vmem:[%s3 + $0x348] sm:$0xff]
  %v909 = vld [vmem:[%s3 + $0x350] sm:$0xff]
  %v910 = vld [vmem:[%s3 + $0x358] sm:$0xff]
  %v911 = vld [vmem:[%s3 + $0x360] sm:$0xff]
  %v912 = vld [vmem:[%s3 + $0x368] sm:$0xff]
  %v913 = vld [vmem:[%s3 + $0x370] sm:$0xff]
  %v914 = vld [vmem:[%s3 + $0x378] sm:$0xff]
  %v915 = vld [vmem:[%s3 + $0x380] sm:$0xff]
  %v916 = vld [vmem:[%s3 + $0x388] sm:$0xff]
  %v917 = vld [vmem:[%s3 + $0x390] sm:$0xff]
  %v918 = vld [vmem:[%s3 + $0x398] sm:$0xff]
  %v919 = vld [vmem:[%s3 + $0x3a0] sm:$0xff]
  %v920 = vld [vmem:[%s3 + $0x3a8] sm:$0xff]
  %v921 = vld [vmem:[%s3 + $0x3b0] sm:$0xff]
  %v922 = vld [vmem:[%s3 + $0x3b8] sm:$0xff]
  %v923 = vld [vmem:[%s3 + $0x3c0] sm:$0xff]
  %v924 = vld [vmem:[%s3 + $0x3c8] sm:$0xff]
  %v925 = vld [vmem:[%s3 + $0x3d0] sm:$0xff]
  %v926 = vld [vmem:[%s3 + $0x3d8] sm:$0xff]
  %v927 = vld [vmem:[%s3 + $0x3e0] sm:$0xff]
  %v928 = vld [vmem:[%s3 + $0x3e8] sm:$0xff]
  %v929 = vld [vmem:[%s3 + $0x3f0] sm:$0xff]
  %v930 = vld [vmem:[%s3 + $0x3f8] sm:$0xff]
  %v931 = vld [vmem:[%s4] sm:$0x1]
  %v933 = vlaneseq
  %v934 = vshrl.u32 %v933, 7
  %v935 = vsub.s32 0, %v934
  %v936 = vrot.slane %v931, %v935
  %938 = vmatprep.subr.mxu0 0.0
  %939 = vmatpush1.msra.mxu0 %v803
  %940 = vmatprep.subr.mxu0 0.0
  %941 = vmatpush1.msra.mxu0 %v804
  %942 = vmatprep.subr.mxu0 0.0
  %943 = vmatpush1.msra.mxu0 %v805
  %944 = vmatprep.subr.mxu0 0.0
  %945 = vmatpush1.msra.mxu0 %v806
  %946 = vmatprep.subr.mxu0 0.0
  %947 = vmatpush1.msra.mxu0 %v807
  %948 = vmatprep.subr.mxu0 0.0
  %949 = vmatpush1.msra.mxu0 %v808
  %950 = vmatprep.subr.mxu0 0.0
  %951 = vmatpush1.msra.mxu0 %v809
  %952 = vmatprep.subr.mxu0 0.0
  %953 = vmatpush1.msra.mxu0 %v810
  %954 = vmatprep.subr.mxu0 0.0
  %955 = vmatpush1.msra.mxu0 %v811
  %956 = vmatprep.subr.mxu0 0.0
  %957 = vmatpush1.msra.mxu0 %v812
  %958 = vmatprep.subr.mxu0 0.0
  %959 = vmatpush1.msra.mxu0 %v813
  %960 = vmatprep.subr.mxu0 0.0
  %961 = vmatpush1.msra.mxu0 %v814
  %962 = vmatprep.subr.mxu0 0.0
  %963 = vmatpush1.msra.mxu0 %v815
  %964 = vmatprep.subr.mxu0 0.0
  %965 = vmatpush1.msra.mxu0 %v816
  %966 = vmatprep.subr.mxu0 0.0
  %967 = vmatpush1.msra.mxu0 %v817
  %968 = vmatprep.subr.mxu0 0.0
  %969 = vmatpush1.msra.mxu0 %v818
  %970 = vmatprep.subr.mxu0 0.0
  %971 = vmatpush1.msra.mxu0 %v819
  %972 = vmatprep.subr.mxu0 0.0
  %973 = vmatpush1.msra.mxu0 %v820
  %974 = vmatprep.subr.mxu0 0.0
  %975 = vmatpush1.msra.mxu0 %v821
  %976 = vmatprep.subr.mxu0 0.0
  %977 = vmatpush1.msra.mxu0 %v822
  %978 = vmatprep.subr.mxu0 0.0
  %979 = vmatpush1.msra.mxu0 %v823
  %980 = vmatprep.subr.mxu0 0.0
  %981 = vmatpush1.msra.mxu0 %v824
  %982 = vmatprep.subr.mxu0 0.0
  %983 = vmatpush1.msra.mxu0 %v825
  %984 = vmatprep.subr.mxu0 0.0
  %985 = vmatpush1.msra.mxu0 %v826
  %986 = vmatprep.subr.mxu0 0.0
  %987 = vmatpush1.msra.mxu0 %v827
  %988 = vmatprep.subr.mxu0 0.0
  %989 = vmatpush1.msra.mxu0 %v828
  %990 = vmatprep.subr.mxu0 0.0
  %991 = vmatpush1.msra.mxu0 %v829
  %992 = vmatprep.subr.mxu0 0.0
  %993 = vmatpush1.msra.mxu0 %v830
  %994 = vmatprep.subr.mxu0 0.0
  %995 = vmatpush1.msra.mxu0 %v831
  %996 = vmatprep.subr.mxu0 0.0
  %997 = vmatpush1.msra.mxu0 %v832
  %998 = vmatprep.subr.mxu0 0.0
  %999 = vmatpush1.msra.mxu0 %v833
  %1000 = vmatprep.subr.mxu0 0.0
  %1001 = vmatpush1.msra.mxu0 %v834
  %1002 = vmatprep.mubr.f32.mxu0 %v228
  %1003 = vmatmul.mubr.f32.gmra.mrb[0].mxu0 %v226
  %v1004 = vpop.f32.mrb[0].mxu0
  %v1005 = vadd.f32 %v936, %v1004
  %v1006 = vpop.f32.mrb[0].mxu0
  %1007 = vmatprep.mubr.f32.mxu0 %v234
  %1008 = vmatmul.mubr.f32.gmra.mrb[0].mxu0 %v232
  %v1009 = vpop.f32.mrb[0].mxu0
  %v1010 = vadd.f32 %v936, %v1009
  %v1011 = vpop.f32.mrb[0].mxu0
  %1012 = vmatprep.mubr.f32.mxu0 %v240
  %1013 = vmatmul.mubr.f32.gmra.mrb[0].mxu0 %v238
  %v1014 = vpop.f32.mrb[0].mxu0
  %v1015 = vadd.f32 %v936, %v1014
  %v1016 = vpop.f32.mrb[0].mxu0
  %1017 = vmatprep.mubr.f32.mxu0 %v246
  %1018 = vmatmul.mubr.f32.gmra.mrb[0].mxu0 %v244
  %v1019 = vpop.f32.mrb[0].mxu0
  %v1020 = vadd.f32 %v936, %v1019
  %v1021 = vpop.f32.mrb[0].mxu0
  %1022 = vmatprep.mubr.f32.mxu0 %v252
  %1023 = vmatmul.mubr.f32.gmra.mrb[0].mxu0 %v250
  %v1024 = vpop.f32.mrb[0].mxu0
  %v1025 = vadd.f32 %v936, %v1024
  %v1026 = vpop.f32.mrb[0].mxu0
  %1027 = vmatprep.mubr.f32.mxu0 %v258
  %1028 = vmatmul.mubr.f32.gmra.mrb[0].mxu0 %v256
  %v1029 = vpop.f32.mrb[0].mxu0
  %v1030 = vadd.f32 %v936, %v1029
  %v1031 = vpop.f32.mrb[0].mxu0
  %1032 = vmatprep.mubr.f32.mxu0 %v264
  %1033 = vmatmul.mubr.f32.gmra.mrb[0].mxu0 %v262
  %v1034 = vpop.f32.mrb[0].mxu0
  %v1035 = vadd.f32 %v936, %v1034
  %v1036 = vpop.f32.mrb[0].mxu0
  %1037 = vmatprep.mubr.f32.mxu0 %v270
  %1038 = vmatmul.mubr.f32.gmra.mrb[0].mxu0 %v268
  %v1039 = vpop.f32.mrb[0].mxu0
  %v1040 = vadd.f32 %v936, %v1039
  %v1041 = vpop.f32.mrb[0].mxu0
  %1042 = vmatprep.mubr.f32.mxu0 %v276
  %1043 = vmatmul.mubr.f32.gmra.mrb[0].mxu0 %v274
  %v1044 = vpop.f32.mrb[0].mxu0
  %v1045 = vadd.f32 %v936, %v1044
  %v1046 = vpop.f32.mrb[0].mxu0
  %1047 = vmatprep.mubr.f32.mxu0 %v282
  %1048 = vmatmul.mubr.f32.gmra.mrb[0].mxu0 %v280
  %v1049 = vpop.f32.mrb[0].mxu0
  %v1050 = vadd.f32 %v936, %v1049
  %v1051 = vpop.f32.mrb[0].mxu0
  %1052 = vmatprep.mubr.f32.mxu0 %v288
  %1053 = vmatmul.mubr.f32.gmra.mrb[0].mxu0 %v286
  %v1054 = vpop.f32.mrb[0].mxu0
  %v1055 = vadd.f32 %v936, %v1054
  %v1056 = vpop.f32.mrb[0].mxu0
  %1057 = vmatprep.mubr.f32.mxu0 %v294
  %1058 = vmatmul.mubr.f32.gmra.mrb[0].mxu0 %v292
  %v1059 = vpop.f32.mrb[0].mxu0
  %v1060 = vadd.f32 %v936, %v1059
  %v1061 = vpop.f32.mrb[0].mxu0
  %1062 = vmatprep.mubr.f32.mxu0 %v300
  %1063 = vmatmul.mubr.f32.gmra.mrb[0].mxu0 %v298
  %v1064 = vpop.f32.mrb[0].mxu0
  %v1065 = vadd.f32 %v936, %v1064
  %v1066 = vpop.f32.mrb[0].mxu0
  %1067 = vmatprep.mubr.f32.mxu0 %v306
  %1068 = vmatmul.mubr.f32.gmra.mrb[0].mxu0 %v304
  %v1069 = vpop.f32.mrb[0].mxu0
  %v1070 = vadd.f32 %v936, %v1069
  %v1071 = vpop.f32.mrb[0].mxu0
  %1072 = vmatprep.mubr.f32.mxu0 %v312
  %1073 = vmatmul.mubr.f32.gmra.mrb[0].mxu0 %v310
  %v1074 = vpop.f32.mrb[0].mxu0
  %v1075 = vadd.f32 %v936, %v1074
  %v1076 = vpop.f32.mrb[0].mxu0
  %1077 = vmatprep.mubr.f32.mxu0 %v318
  %1078 = vmatmul.mubr.f32.gmra.mrb[0].mxu0 %v316
  %v1079 = vpop.f32.mrb[0].mxu0
  %v1080 = vadd.f32 %v936, %v1079
  %v1081 = vpop.f32.mrb[0].mxu0
  %1082 = vdwg.mxu0
  %1083 = vmatprep.subr.mxu0 0.0
  %1084 = vmatpush1.msra.mxu0 %v835
  %1085 = vmatprep.subr.mxu0 0.0
  %1086 = vmatpush1.msra.mxu0 %v836
  %1087 = vmatprep.subr.mxu0 0.0
  %1088 = vmatpush1.msra.mxu0 %v837
  %1089 = vmatprep.subr.mxu0 0.0
  %1090 = vmatpush1.msra.mxu0 %v838
  %1091 = vmatprep.subr.mxu0 0.0
  %1092 = vmatpush1.msra.mxu0 %v839
  %1093 = vmatprep.subr.mxu0 0.0
  %1094 = vmatpush1.msra.mxu0 %v840
  %1095 = vmatprep.subr.mxu0 0.0
  %1096 = vmatpush1.msra.mxu0 %v841
  %1097 = vmatprep.subr.mxu0 0.0
  %1098 = vmatpush1.msra.mxu0 %v842
  %1099 = vmatprep.subr.mxu0 0.0
  %1100 = vmatpush1.msra.mxu0 %v843
  %1101 = vmatprep.subr.mxu0 0.0
  %1102 = vmatpush1.msra.mxu0 %v844
  %1103 = vmatprep.subr.mxu0 0.0
  %1104 = vmatpush1.msra.mxu0 %v845
  %1105 = vmatprep.subr.mxu0 0.0
  %1106 = vmatpush1.msra.mxu0 %v846
  %1107 = vmatprep.subr.mxu0 0.0
  %1108 = vmatpush1.msra.mxu0 %v847
  %1109 = vmatprep.subr.mxu0 0.0
  %1110 = vmatpush1.msra.mxu0 %v848
  %1111 = vmatprep.subr.mxu0 0.0
  %1112 = vmatpush1.msra.mxu0 %v849
  %1113 = vmatprep.subr.mxu0 0.0
  %1114 = vmatpush1.msra.mxu0 %v850
  %1115 = vmatprep.subr.mxu0 0.0
  %1116 = vmatpush1.msra.mxu0 %v851
  %1117 = vmatprep.subr.mxu0 0.0
  %1118 = vmatpush1.msra.mxu0 %v852
  %1119 = vmatprep.subr.mxu0 0.0
  %1120 = vmatpush1.msra.mxu0 %v853
  %1121 = vmatprep.subr.mxu0 0.0
  %1122 = vmatpush1.msra.mxu0 %v854
  %1123 = vmatprep.subr.mxu0 0.0
  %1124 = vmatpush1.msra.mxu0 %v855
  %1125 = vmatprep.subr.mxu0 0.0
  %1126 = vmatpush1.msra.mxu0 %v856
  %1127 = vmatprep.subr.mxu0 0.0
  %1128 = vmatpush1.msra.mxu0 %v857
  %1129 = vmatprep.subr.mxu0 0.0
  %1130 = vmatpush1.msra.mxu0 %v858
  %1131 = vmatprep.subr.mxu0 0.0
  %1132 = vmatpush1.msra.mxu0 %v859
  %1133 = vmatprep.subr.mxu0 0.0
  %1134 = vmatpush1.msra.mxu0 %v860
  %1135 = vmatprep.subr.mxu0 0.0
  %1136 = vmatpush1.msra.mxu0 %v861
  %1137 = vmatprep.subr.mxu0 0.0
  %1138 = vmatpush1.msra.mxu0 %v862
  %1139 = vmatprep.subr.mxu0 0.0
  %1140 = vmatpush1.msra.mxu0 %v863
  %1141 = vmatprep.subr.mxu0 0.0
  %1142 = vmatpush1.msra.mxu0 %v864
  %1143 = vmatprep.subr.mxu0 0.0
  %1144 = vmatpush1.msra.mxu0 %v865
  %1145 = vmatprep.subr.mxu0 0.0
  %1146 = vmatpush1.msra.mxu0 %v866
  %1147 = vmatprep.mubr.f32.mxu0 %v389
  %1148 = vmatmul.mubr.f32.gmra.mrb[0].mxu0 %v387
  %v1149 = vpop.f32.mrb[0].mxu0
  %v1150 = vadd.f32 %v1005, %v1149
  %v1151 = vpop.f32.mrb[0].mxu0
  %1152 = vmatprep.mubr.f32.mxu0 %v395
  %1153 = vmatmul.mubr.f32.gmra.mrb[0].mxu0 %v393
  %v1154 = vpop.f32.mrb[0].mxu0
  %v1155 = vadd.f32 %v1010, %v1154
  %v1156 = vpop.f32.mrb[0].mxu0
  %1157 = vmatprep.mubr.f32.mxu0 %v401
  %1158 = vmatmul.mubr.f32.gmra.mrb[0].mxu0 %v399
  %v1159 = vpop.f32.mrb[0].mxu0
  %v1160 = vadd.f32 %v1015, %v1159
  %v1161 = vpop.f32.mrb[0].mxu0
  %1162 = vmatprep.mubr.f32.mxu0 %v407
  %1163 = vmatmul.mubr.f32.gmra.mrb[0].mxu0 %v405
  %v1164 = vpop.f32.mrb[0].mxu0
  %v1165 = vadd.f32 %v1020, %v1164
  %v1166 = vpop.f32.mrb[0].mxu0
  %1167 = vmatprep.mubr.f32.mxu0 %v413
  %1168 = vmatmul.mubr.f32.gmra.mrb[0].mxu0 %v411
  %v1169 = vpop.f32.mrb[0].mxu0
  %v1170 = vadd.f32 %v1025, %v1169
  %v1171 = vpop.f32.mrb[0].mxu0
  %1172 = vmatprep.mubr.f32.mxu0 %v419
  %1173 = vmatmul.mubr.f32.gmra.mrb[0].mxu0 %v417
  %v1174 = vpop.f32.mrb[0].mxu0
  %v1175 = vadd.f32 %v1030, %v1174
  %v1176 = vpop.f32.mrb[0].mxu0
  %1177 = vmatprep.mubr.f32.mxu0 %v425
  %1178 = vmatmul.mubr.f32.gmra.mrb[0].mxu0 %v423
  %v1179 = vpop.f32.mrb[0].mxu0
  %v1180 = vadd.f32 %v1035, %v1179
  %v1181 = vpop.f32.mrb[0].mxu0
  %1182 = vmatprep.mubr.f32.mxu0 %v431
  %1183 = vmatmul.mubr.f32.gmra.mrb[0].mxu0 %v429
  %v1184 = vpop.f32.mrb[0].mxu0
  %v1185 = vadd.f32 %v1040, %v1184
  %v1186 = vpop.f32.mrb[0].mxu0
  %1187 = vmatprep.mubr.f32.mxu0 %v437
  %1188 = vmatmul.mubr.f32.gmra.mrb[0].mxu0 %v435
  %v1189 = vpop.f32.mrb[0].mxu0
  %v1190 = vadd.f32 %v1045, %v1189
  %v1191 = vpop.f32.mrb[0].mxu0
  %1192 = vmatprep.mubr.f32.mxu0 %v443
  %1193 = vmatmul.mubr.f32.gmra.mrb[0].mxu0 %v441
  %v1194 = vpop.f32.mrb[0].mxu0
  %v1195 = vadd.f32 %v1050, %v1194
  %v1196 = vpop.f32.mrb[0].mxu0
  %1197 = vmatprep.mubr.f32.mxu0 %v449
  %1198 = vmatmul.mubr.f32.gmra.mrb[0].mxu0 %v447
  %v1199 = vpop.f32.mrb[0].mxu0
  %v1200 = vadd.f32 %v1055, %v1199
  %v1201 = vpop.f32.mrb[0].mxu0
  %1202 = vmatprep.mubr.f32.mxu0 %v455
  %1203 = vmatmul.mubr.f32.gmra.mrb[0].mxu0 %v453
  %v1204 = vpop.f32.mrb[0].mxu0
  %v1205 = vadd.f32 %v1060, %v1204
  %v1206 = vpop.f32.mrb[0].mxu0
  %1207 = vmatprep.mubr.f32.mxu0 %v461
  %1208 = vmatmul.mubr.f32.gmra.mrb[0].mxu0 %v459
  %v1209 = vpop.f32.mrb[0].mxu0
  %v1210 = vadd.f32 %v1065, %v1209
  %v1211 = vpop.f32.mrb[0].mxu0
  %1212 = vmatprep.mubr.f32.mxu0 %v467
  %1213 = vmatmul.mubr.f32.gmra.mrb[0].mxu0 %v465
  %v1214 = vpop.f32.mrb[0].mxu0
  %v1215 = vadd.f32 %v1070, %v1214
  %v1216 = vpop.f32.mrb[0].mxu0
  %1217 = vmatprep.mubr.f32.mxu0 %v473
  %1218 = vmatmul.mubr.f32.gmra.mrb[0].mxu0 %v471
  %v1219 = vpop.f32.mrb[0].mxu0
  %v1220 = vadd.f32 %v1075, %v1219
  %v1221 = vpop.f32.mrb[0].mxu0
  %1222 = vmatprep.mubr.f32.mxu0 %v479
  %1223 = vmatmul.mubr.f32.gmra.mrb[0].mxu0 %v477
  %v1224 = vpop.f32.mrb[0].mxu0
  %v1225 = vadd.f32 %v1080, %v1224
  %v1226 = vpop.f32.mrb[0].mxu0
  %1227 = vdwg.mxu0
  %1228 = vmatprep.subr.mxu0 0.0
  %1229 = vmatpush1.msra.mxu0 %v867
  %1230 = vmatprep.subr.mxu0 0.0
  %1231 = vmatpush1.msra.mxu0 %v868
  %1232 = vmatprep.subr.mxu0 0.0
  %1233 = vmatpush1.msra.mxu0 %v869
  %1234 = vmatprep.subr.mxu0 0.0
  %1235 = vmatpush1.msra.mxu0 %v870
  %1236 = vmatprep.subr.mxu0 0.0
  %1237 = vmatpush1.msra.mxu0 %v871
  %1238 = vmatprep.subr.mxu0 0.0
  %1239 = vmatpush1.msra.mxu0 %v872
  %1240 = vmatprep.subr.mxu0 0.0
  %1241 = vmatpush1.msra.mxu0 %v873
  %1242 = vmatprep.subr.mxu0 0.0
  %1243 = vmatpush1.msra.mxu0 %v874
  %1244 = vmatprep.subr.mxu0 0.0
  %1245 = vmatpush1.msra.mxu0 %v875
  %1246 = vmatprep.subr.mxu0 0.0
  %1247 = vmatpush1.msra.mxu0 %v876
  %1248 = vmatprep.subr.mxu0 0.0
  %1249 = vmatpush1.msra.mxu0 %v877
  %1250 = vmatprep.subr.mxu0 0.0
  %1251 = vmatpush1.msra.mxu0 %v878
  %1252 = vmatprep.subr.mxu0 0.0
  %1253 = vmatpush1.msra.mxu0 %v879
  %1254 = vmatprep.subr.mxu0 0.0
  %1255 = vmatpush1.msra.mxu0 %v880
  %1256 = vmatprep.subr.mxu0 0.0
  %1257 = vmatpush1.msra.mxu0 %v881
  %1258 = vmatprep.subr.mxu0 0.0
  %1259 = vmatpush1.msra.mxu0 %v882
  %1260 = vmatprep.subr.mxu0 0.0
  %1261 = vmatpush1.msra.mxu0 %v883
  %1262 = vmatprep.subr.mxu0 0.0
  %1263 = vmatpush1.msra.mxu0 %v884
  %1264 = vmatprep.subr.mxu0 0.0
  %1265 = vmatpush1.msra.mxu0 %v885
  %1266 = vmatprep.subr.mxu0 0.0
  %1267 = vmatpush1.msra.mxu0 %v886
  %1268 = vmatprep.subr.mxu0 0.0
  %1269 = vmatpush1.msra.mxu0 %v887
  %1270 = vmatprep.subr.mxu0 0.0
  %1271 = vmatpush1.msra.mxu0 %v888
  %1272 = vmatprep.subr.mxu0 0.0
  %1273 = vmatpush1.msra.mxu0 %v889
  %1274 = vmatprep.subr.mxu0 0.0
  %1275 = vmatpush1.msra.mxu0 %v890
  %1276 = vmatprep.subr.mxu0 0.0
  %1277 = vmatpush1.msra.mxu0 %v891
  %1278 = vmatprep.subr.mxu0 0.0
  %1279 = vmatpush1.msra.mxu0 %v892
  %1280 = vmatprep.subr.mxu0 0.0
  %1281 = vmatpush1.msra.mxu0 %v893
  %1282 = vmatprep.subr.mxu0 0.0
  %1283 = vmatpush1.msra.mxu0 %v894
  %1284 = vmatprep.subr.mxu0 0.0
  %1285 = vmatpush1.msra.mxu0 %v895
  %1286 = vmatprep.subr.mxu0 0.0
  %1287 = vmatpush1.msra.mxu0 %v896
  %1288 = vmatprep.subr.mxu0 0.0
  %1289 = vmatpush1.msra.mxu0 %v897
  %1290 = vmatprep.subr.mxu0 0.0
  %1291 = vmatpush1.msra.mxu0 %v898
  %1292 = vmatprep.mubr.f32.mxu0 %v550
  %1293 = vmatmul.mubr.f32.gmra.mrb[0].mxu0 %v548
  %v1294 = vpop.f32.mrb[0].mxu0
  %v1295 = vadd.f32 %v1150, %v1294
  %v1296 = vpop.f32.mrb[0].mxu0
  %1297 = vmatprep.mubr.f32.mxu0 %v556
  %1298 = vmatmul.mubr.f32.gmra.mrb[0].mxu0 %v554
  %v1299 = vpop.f32.mrb[0].mxu0
  %v1300 = vadd.f32 %v1155, %v1299
  %v1301 = vpop.f32.mrb[0].mxu0
  %1302 = vmatprep.mubr.f32.mxu0 %v562
  %1303 = vmatmul.mubr.f32.gmra.mrb[0].mxu0 %v560
  %v1304 = vpop.f32.mrb[0].mxu0
  %v1305 = vadd.f32 %v1160, %v1304
  %v1306 = vpop.f32.mrb[0].mxu0
  %1307 = vmatprep.mubr.f32.mxu0 %v568
  %1308 = vmatmul.mubr.f32.gmra.mrb[0].mxu0 %v566
  %v1309 = vpop.f32.mrb[0].mxu0
  %v1310 = vadd.f32 %v1165, %v1309
  %v1311 = vpop.f32.mrb[0].mxu0
  %1312 = vmatprep.mubr.f32.mxu0 %v574
  %1313 = vmatmul.mubr.f32.gmra.mrb[0].mxu0 %v572
  %v1314 = vpop.f32.mrb[0].mxu0
  %v1315 = vadd.f32 %v1170, %v1314
  %v1316 = vpop.f32.mrb[0].mxu0
  %1317 = vmatprep.mubr.f32.mxu0 %v580
  %1318 = vmatmul.mubr.f32.gmra.mrb[0].mxu0 %v578
  %v1319 = vpop.f32.mrb[0].mxu0
  %v1320 = vadd.f32 %v1175, %v1319
  %v1321 = vpop.f32.mrb[0].mxu0
  %1322 = vmatprep.mubr.f32.mxu0 %v586
  %1323 = vmatmul.mubr.f32.gmra.mrb[0].mxu0 %v584
  %v1324 = vpop.f32.mrb[0].mxu0
  %v1325 = vadd.f32 %v1180, %v1324
  %v1326 = vpop.f32.mrb[0].mxu0
  %1327 = vmatprep.mubr.f32.mxu0 %v592
  %1328 = vmatmul.mubr.f32.gmra.mrb[0].mxu0 %v590
  %v1329 = vpop.f32.mrb[0].mxu0
  %v1330 = vadd.f32 %v1185, %v1329
  %v1331 = vpop.f32.mrb[0].mxu0
  %1332 = vmatprep.mubr.f32.mxu0 %v598
  %1333 = vmatmul.mubr.f32.gmra.mrb[0].mxu0 %v596
  %v1334 = vpop.f32.mrb[0].mxu0
  %v1335 = vadd.f32 %v1190, %v1334
  %v1336 = vpop.f32.mrb[0].mxu0
  %1337 = vmatprep.mubr.f32.mxu0 %v604
  %1338 = vmatmul.mubr.f32.gmra.mrb[0].mxu0 %v602
  %v1339 = vpop.f32.mrb[0].mxu0
  %v1340 = vadd.f32 %v1195, %v1339
  %v1341 = vpop.f32.mrb[0].mxu0
  %1342 = vmatprep.mubr.f32.mxu0 %v610
  %1343 = vmatmul.mubr.f32.gmra.mrb[0].mxu0 %v608
  %v1344 = vpop.f32.mrb[0].mxu0
  %v1345 = vadd.f32 %v1200, %v1344
  %v1346 = vpop.f32.mrb[0].mxu0
  %1347 = vmatprep.mubr.f32.mxu0 %v616
  %1348 = vmatmul.mubr.f32.gmra.mrb[0].mxu0 %v614
  %v1349 = vpop.f32.mrb[0].mxu0
  %v1350 = vadd.f32 %v1205, %v1349
  %v1351 = vpop.f32.mrb[0].mxu0
  %1352 = vmatprep.mubr.f32.mxu0 %v622
  %1353 = vmatmul.mubr.f32.gmra.mrb[0].mxu0 %v620
  %v1354 = vpop.f32.mrb[0].mxu0
  %v1355 = vadd.f32 %v1210, %v1354
  %v1356 = vpop.f32.mrb[0].mxu0
  %1357 = vmatprep.mubr.f32.mxu0 %v628
  %1358 = vmatmul.mubr.f32.gmra.mrb[0].mxu0 %v626
  %v1359 = vpop.f32.mrb[0].mxu0
  %v1360 = vadd.f32 %v1215, %v1359
  %v1361 = vpop.f32.mrb[0].mxu0
  %1362 = vmatprep.mubr.f32.mxu0 %v634
  %1363 = vmatmul.mubr.f32.gmra.mrb[0].mxu0 %v632
  %v1364 = vpop.f32.mrb[0].mxu0
  %v1365 = vadd.f32 %v1220, %v1364
  %v1366 = vpop.f32.mrb[0].mxu0
  %1367 = vmatprep.mubr.f32.mxu0 %v640
  %1368 = vmatmul.mubr.f32.gmra.mrb[0].mxu0 %v638
  %v1369 = vpop.f32.mrb[0].mxu0
  %v1370 = vadd.f32 %v1225, %v1369
  %v1371 = vpop.f32.mrb[0].mxu0
  %1372 = vdwg.mxu0
  %1373 = vmatprep.subr.mxu0 0.0
  %1374 = vmatpush1.msra.mxu0 %v899
  %1375 = vmatprep.subr.mxu0 0.0
  %1376 = vmatpush1.msra.mxu0 %v900
  %1377 = vmatprep.subr.mxu0 0.0
  %1378 = vmatpush1.msra.mxu0 %v901
  %1379 = vmatprep.subr.mxu0 0.0
  %1380 = vmatpush1.msra.mxu0 %v902
  %1381 = vmatprep.subr.mxu0 0.0
  %1382 = vmatpush1.msra.mxu0 %v903
  %1383 = vmatprep.subr.mxu0 0.0
  %1384 = vmatpush1.msra.mxu0 %v904
  %1385 = vmatprep.subr.mxu0 0.0
  %1386 = vmatpush1.msra.mxu0 %v905
  %1387 = vmatprep.subr.mxu0 0.0
  %1388 = vmatpush1.msra.mxu0 %v906
  %1389 = vmatprep.subr.mxu0 0.0
  %1390 = vmatpush1.msra.mxu0 %v907
  %1391 = vmatprep.subr.mxu0 0.0
  %1392 = vmatpush1.msra.mxu0 %v908
  %1393 = vmatprep.subr.mxu0 0.0
  %1394 = vmatpush1.msra.mxu0 %v909
  %1395 = vmatprep.subr.mxu0 0.0
  %1396 = vmatpush1.msra.mxu0 %v910
  %1397 = vmatprep.subr.mxu0 0.0
  %1398 = vmatpush1.msra.mxu0 %v911
  %1399 = vmatprep.subr.mxu0 0.0
  %1400 = vmatpush1.msra.mxu0 %v912
  %1401 = vmatprep.subr.mxu0 0.0
  %1402 = vmatpush1.msra.mxu0 %v913
  %1403 = vmatprep.subr.mxu0 0.0
  %1404 = vmatpush1.msra.mxu0 %v914
  %1405 = vmatprep.subr.mxu0 0.0
  %1406 = vmatpush1.msra.mxu0 %v915
  %1407 = vmatprep.subr.mxu0 0.0
  %1408 = vmatpush1.msra.mxu0 %v916
  %1409 = vmatprep.subr.mxu0 0.0
  %1410 = vmatpush1.msra.mxu0 %v917
  %1411 = vmatprep.subr.mxu0 0.0
  %1412 = vmatpush1.msra.mxu0 %v918
  %1413 = vmatprep.subr.mxu0 0.0
  %1414 = vmatpush1.msra.mxu0 %v919
  %1415 = vmatprep.subr.mxu0 0.0
  %1416 = vmatpush1.msra.mxu0 %v920
  %1417 = vmatprep.subr.mxu0 0.0
  %1418 = vmatpush1.msra.mxu0 %v921
  %1419 = vmatprep.subr.mxu0 0.0
  %1420 = vmatpush1.msra.mxu0 %v922
  %1421 = vmatprep.subr.mxu0 0.0
  %1422 = vmatpush1.msra.mxu0 %v923
  %1423 = vmatprep.subr.mxu0 0.0
  %1424 = vmatpush1.msra.mxu0 %v924
  %1425 = vmatprep.subr.mxu0 0.0
  %1426 = vmatpush1.msra.mxu0 %v925
  %1427 = vmatprep.subr.mxu0 0.0
  %1428 = vmatpush1.msra.mxu0 %v926
  %1429 = vmatprep.subr.mxu0 0.0
  %1430 = vmatpush1.msra.mxu0 %v927
  %1431 = vmatprep.subr.mxu0 0.0
  %1432 = vmatpush1.msra.mxu0 %v928
  %1433 = vmatprep.subr.mxu0 0.0
  %1434 = vmatpush1.msra.mxu0 %v929
  %1435 = vmatprep.subr.mxu0 0.0
  %1436 = vmatpush1.msra.mxu0 %v930
  %1437 = vmatprep.mubr.f32.mxu0 %v711
  %1438 = vmatmul.mubr.f32.gmra.mrb[0].mxu0 %v709
  %v1439 = vpop.f32.mrb[0].mxu0
  %v1440 = vadd.f32 %v1295, %v1439
  %v1441 = vpop.f32.mrb[0].mxu0
  %1442 = vmatprep.mubr.f32.mxu0 %v717
  %1443 = vmatmul.mubr.f32.gmra.mrb[0].mxu0 %v715
  %v1444 = vpop.f32.mrb[0].mxu0
  %v1445 = vadd.f32 %v1300, %v1444
  %v1446 = vpop.f32.mrb[0].mxu0
  %1447 = vmatprep.mubr.f32.mxu0 %v723
  %1448 = vmatmul.mubr.f32.gmra.mrb[0].mxu0 %v721
  %v1449 = vpop.f32.mrb[0].mxu0
  %v1450 = vadd.f32 %v1305, %v1449
  %v1451 = vpop.f32.mrb[0].mxu0
  %1452 = vmatprep.mubr.f32.mxu0 %v729
  %1453 = vmatmul.mubr.f32.gmra.mrb[0].mxu0 %v727
  %v1454 = vpop.f32.mrb[0].mxu0
  %v1455 = vadd.f32 %v1310, %v1454
  %v1456 = vpop.f32.mrb[0].mxu0
  %1457 = vmatprep.mubr.f32.mxu0 %v735
  %1458 = vmatmul.mubr.f32.gmra.mrb[0].mxu0 %v733
  %v1459 = vpop.f32.mrb[0].mxu0
  %v1460 = vadd.f32 %v1315, %v1459
  %v1461 = vpop.f32.mrb[0].mxu0
  %1462 = vmatprep.mubr.f32.mxu0 %v741
  %1463 = vmatmul.mubr.f32.gmra.mrb[0].mxu0 %v739
  %v1464 = vpop.f32.mrb[0].mxu0
  %v1465 = vadd.f32 %v1320, %v1464
  %v1466 = vpop.f32.mrb[0].mxu0
  %1467 = vmatprep.mubr.f32.mxu0 %v747
  %1468 = vmatmul.mubr.f32.gmra.mrb[0].mxu0 %v745
  %v1469 = vpop.f32.mrb[0].mxu0
  %v1470 = vadd.f32 %v1325, %v1469
  %v1471 = vpop.f32.mrb[0].mxu0
  %1472 = vmatprep.mubr.f32.mxu0 %v753
  %1473 = vmatmul.mubr.f32.gmra.mrb[0].mxu0 %v751
  %v1474 = vpop.f32.mrb[0].mxu0
  %v1475 = vadd.f32 %v1330, %v1474
  %v1476 = vpop.f32.mrb[0].mxu0
  %1477 = vmatprep.mubr.f32.mxu0 %v759
  %1478 = vmatmul.mubr.f32.gmra.mrb[0].mxu0 %v757
  %v1479 = vpop.f32.mrb[0].mxu0
  %v1480 = vadd.f32 %v1335, %v1479
  %v1481 = vpop.f32.mrb[0].mxu0
  %1482 = vmatprep.mubr.f32.mxu0 %v765
  %1483 = vmatmul.mubr.f32.gmra.mrb[0].mxu0 %v763
  %v1484 = vpop.f32.mrb[0].mxu0
  %v1485 = vadd.f32 %v1340, %v1484
  %v1486 = vpop.f32.mrb[0].mxu0
  %1487 = vmatprep.mubr.f32.mxu0 %v771
  %1488 = vmatmul.mubr.f32.gmra.mrb[0].mxu0 %v769
  %v1489 = vpop.f32.mrb[0].mxu0
  %v1490 = vadd.f32 %v1345, %v1489
  %v1491 = vpop.f32.mrb[0].mxu0
  %1492 = vmatprep.mubr.f32.mxu0 %v777
  %1493 = vmatmul.mubr.f32.gmra.mrb[0].mxu0 %v775
  %v1494 = vpop.f32.mrb[0].mxu0
  %v1495 = vadd.f32 %v1350, %v1494
  %v1496 = vpop.f32.mrb[0].mxu0
  %1497 = vmatprep.mubr.f32.mxu0 %v783
  %1498 = vmatmul.mubr.f32.gmra.mrb[0].mxu0 %v781
  %v1499 = vpop.f32.mrb[0].mxu0
  %v1500 = vadd.f32 %v1355, %v1499
  %v1501 = vpop.f32.mrb[0].mxu0
  %1502 = vmatprep.mubr.f32.mxu0 %v789
  %1503 = vmatmul.mubr.f32.gmra.mrb[0].mxu0 %v787
  %v1504 = vpop.f32.mrb[0].mxu0
  %v1505 = vadd.f32 %v1360, %v1504
  %v1506 = vpop.f32.mrb[0].mxu0
  %1507 = vmatprep.mubr.f32.mxu0 %v795
  %1508 = vmatmul.mubr.f32.gmra.mrb[0].mxu0 %v793
  %v1509 = vpop.f32.mrb[0].mxu0
  %v1510 = vadd.f32 %v1365, %v1509
  %v1511 = vpop.f32.mrb[0].mxu0
  %1512 = vmatprep.mubr.f32.mxu0 %v801
  %1513 = vmatmul.mubr.f32.gmra.mrb[0].mxu0 %v799
  %v1514 = vpop.f32.mrb[0].mxu0
  %v1515 = vadd.f32 %v1370, %v1514
  %v1516 = vpop.f32.mrb[0].mxu0
  %1517 = vdwg.mxu0
  %1518 = vxpose.xlu0.b32.start [1/16] %v1440, 128
  %1519 = vxpose.xlu0.b32.cont [2/16] %v1445, 128
  %1520 = vxpose.xlu0.b32.cont [3/16] %v1450, 128
  %1521 = vxpose.xlu0.b32.cont [4/16] %v1455, 128
  %1522 = vxpose.xlu0.b32.cont [5/16] %v1460, 128
  %1523 = vxpose.xlu0.b32.cont [6/16] %v1465, 128
  %1524 = vxpose.xlu0.b32.cont [7/16] %v1470, 128
  %1525 = vxpose.xlu0.b32.cont [8/16] %v1475, 128
  %1526 = vxpose.xlu0.b32.cont [9/16] %v1480, 128
  %1527 = vxpose.xlu0.b32.cont [10/16] %v1485, 128
  %1528 = vxpose.xlu0.b32.cont [11/16] %v1490, 128
  %1529 = vxpose.xlu0.b32.cont [12/16] %v1495, 128
  %1530 = vxpose.xlu0.b32.cont [13/16] %v1500, 128
  %1531 = vxpose.xlu0.b32.cont [14/16] %v1505, 128
  %1532 = vxpose.xlu0.b32.cont [15/16] %v1510, 128
  %1533 = vxpose.xlu0.b32.end [16/16] %v1515, 128
  %v1534 = vpop.trf.xlu0
  %v1535 = vpop.trf.xlu0
  %v1536 = vpop.trf.xlu0
  %v1537 = vpop.trf.xlu0
  %v1538 = vpop.trf.xlu0
  %v1539 = vpop.trf.xlu0
  %v1540 = vpop.trf.xlu0
  %v1541 = vpop.trf.xlu0
  %v1542 = vpop.trf.xlu0
  %v1543 = vpop.trf.xlu0
  %v1544 = vpop.trf.xlu0
  %v1545 = vpop.trf.xlu0
  %v1546 = vpop.trf.xlu0
  %v1547 = vpop.trf.xlu0
  %v1548 = vpop.trf.xlu0
  %v1549 = vpop.trf.xlu0
  %1550 = vst [vmem:[%s5] sm:$0x1] %v1534
  // Predicated region
  $region22: #{aesthetic_predictor_forward.1} parent=0 // pred_check
    _
  $region23: #{aesthetic_predictor_forward.1} parent=0 // pred_check_branch
    %1552 = sbr.rel (0) target = $region25
  $region24: #{aesthetic_predictor_forward.1} parent=0 // pred_region
    _
  $region25: #{aesthetic_predictor_forward.1} parent=0 // pred_fallthru
    _
  // Predicated region
  $region26: #{aesthetic_predictor_forward.1} parent=0 // pred_check
    _
  $region27: #{aesthetic_predictor_forward.1} parent=0 // pred_check_branch
    %1554 = sbr.rel (0) target = $region29
  $region28: #{aesthetic_predictor_forward.1} parent=0 // pred_region
    _
  $region29: #{aesthetic_predictor_forward.1} parent=0 // pred_fallthru
    _

</llo_original>
